<compile_context>
chip_gen: v7x
topology: tpu7x:2x2x1
jax: 0.10.0
libtpu: 0.0.40
codegen_flags: <defaults>
</compile_context>

<pallas_src>
import math
import functools

import jax
import jax.numpy as jnp
from jax import lax
from jax.experimental import pallas as pl
from jax.experimental.pallas import tpu as pltpu


# ---------------------------------------------------------------------------
# Small helpers
# ---------------------------------------------------------------------------

def _mm(a, b):
    """MXU matmul with f32 accumulation (operands already in compute dtype)."""
    return jnp.dot(a, b, preferred_element_type=jnp.float32)


def _layernorm(x, g, b):
    mu = jnp.mean(x, axis=-1, keepdims=True)
    xc = x - mu
    var = jnp.mean(xc * xc, axis=-1, keepdims=True)
    return xc * lax.rsqrt(var + 1e-5) * g + b


def _pick_tile(n, target, align=8):
    """Largest divisor of n that is <= target and a multiple of `align`
    (falls back to the full extent so the (8,128) BlockSpec rule holds)."""
    if n <= target:
        return n
    for t in range(target, 0, -1):
        if n % t == 0 and t % align == 0:
            return t
    # TODO(synk): at e.g. nq=900 pad to 1024 instead of falling back to full.
    return n


_VMEM_LIMIT = "unset"


def _vmem_limit_bytes():
    """Explicit scoped-VMEM limit: ~100 MiB on v5e/v6e, ~56 MiB on v7x."""
    global _VMEM_LIMIT
    if _VMEM_LIMIT == "unset":
        try:
            cap = int(pltpu.get_tpu_info().vmem_capacity_bytes)
            _VMEM_LIMIT = max(32 << 20, min(cap - (8 << 20), 100 << 20))
        except Exception:
            _VMEM_LIMIT = None      # keep compiler default
    return _VMEM_LIMIT


def _compiler_params(dims):
    kw = dict(dimension_semantics=dims)
    vlim = _vmem_limit_bytes()
    if vlim is not None:
        kw["vmem_limit_bytes"] = vlim
    return pltpu.CompilerParams(**kw)


_BUF1_SUPPORTED = None


def _buffered_one_supported():
    """Probe once whether pipeline_mode=pl.Buffered(1) (single-buffered
    constant-index weight inputs) works on this JAX/TPU build."""
    global _BUF1_SUPPORTED
    if _BUF1_SUPPORTED is None:
        try:
            def _k(x_ref, o_ref):
                o_ref[...] = x_ref[...] + 1.0

            spec = pl.BlockSpec((8, 128), lambda i: (0, 0),
                                pipeline_mode=pl.Buffered(1))
            fn = pl.pallas_call(
                _k,
                out_shape=jax.ShapeDtypeStruct((8, 128), jnp.float32),
                grid=(1,),
                in_specs=[spec],
                out_specs=pl.BlockSpec((8, 128), lambda i: (0, 0)),
            )
            jax.block_until_ready(fn(jnp.zeros((8, 128), jnp.float32)))
            _BUF1_SUPPORTED = True
        except Exception:
            _BUF1_SUPPORTED = False
    return _BUF1_SUPPORTED


def _const_spec(arr, grid_ndim, single_buffer):
    """BlockSpec for a weight that is identical at every grid step."""
    zeros = (0,) * arr.ndim
    if grid_ndim == 1:
        idx = lambda b: zeros
    else:
        idx = lambda b, qi, ki: zeros
    if single_buffer:
        return pl.BlockSpec(arr.shape, idx, pipeline_mode=pl.Buffered(1))
    return pl.BlockSpec(arr.shape, idx)


# ---------------------------------------------------------------------------
# Kernel 1: self-attention (+ temporal memory) + LayerNorm
# ---------------------------------------------------------------------------

def _self_attn_kernel(*refs, num_heads, has_temp, cdtype):
    if has_temp:
        (q_ref, qp_ref, tm_ref, tp_ref,
         wqk_ref, bqk_ref, wv_ref, bv_ref, wo_ref, bo_ref, ln_ref,
         x1_ref, attn_scr) = refs
    else:
        (q_ref, qp_ref,
         wqk_ref, bqk_ref, wv_ref, bv_ref, wo_ref, bo_ref, ln_ref,
         x1_ref, attn_scr) = refs

    q = q_ref[0]                                   # (nq, D) f32
    qp = qp_ref[0]
    nq, D = q.shape
    hd = D // num_heads
    scale = 1.0 / math.sqrt(hd)

    wqk = wqk_ref[...]                             # (D, 2D)
    bqk = bqk_ref[...]                             # (1, 2D) f32

    # Q and K of the self block share the same input (q + query_pos): one
    # packed (D, 2D) projection instead of two D-wide ones.
    qk_in = (q + qp).astype(cdtype)
    qk = _mm(qk_in, wqk) + bqk                     # (nq, 2D) f32
    q_proj = (qk[:, :D] * scale).astype(cdtype)    # fold 1/sqrt(hd) once into Q
    k_proj = qk[:, D:].astype(cdtype)
    v_proj = (_mm(q.astype(cdtype), wv_ref[...]) + bv_ref[...]).astype(cdtype)

    if has_temp:
        tm = tm_ref[0]
        tp = tp_ref[0]
        wk = wqk[:, D:]
        kt_proj = (_mm((tm + tp).astype(cdtype), wk) + bqk[:, D:]).astype(cdtype)
        vt_proj = (_mm(tm.astype(cdtype), wv_ref[...]) + bv_ref[...]).astype(cdtype)

    # Per-head attention, streaming online softmax over the [self, temporal]
    # K/V blocks; each head's output goes to its static column slice of a
    # (nq, D) scratch so ONE full-D output projection can follow.
    for h in range(num_heads):
        sl = slice(h * hd, (h + 1) * hd)
        qh = q_proj[:, sl]

        s = lax.dot_general(qh, k_proj[:, sl], (((1,), (1,)), ((), ())),
                            preferred_element_type=jnp.float32)
        m = jnp.max(s, axis=-1, keepdims=True)
        p = jnp.exp(s - m)
        den = jnp.sum(p, axis=-1, keepdims=True)
        num = _mm(p.astype(cdtype), v_proj[:, sl])

        if has_temp:
            s2 = lax.dot_general(qh, kt_proj[:, sl], (((1,), (1,)), ((), ())),
                                 preferred_element_type=jnp.float32)
            m2 = jnp.maximum(m, jnp.max(s2, axis=-1, keepdims=True))
            alpha = jnp.exp(m - m2)
            p2 = jnp.exp(s2 - m2)
            den = alpha * den + jnp.sum(p2, axis=-1, keepdims=True)
            num = alpha * num + _mm(p2.astype(cdtype), vt_proj[:, sl])

        attn_scr[:, sl] = num / den                # exact division (parity)

    sa = _mm(attn_scr[...].astype(cdtype), wo_ref[...]) + bo_ref[...]
    x1_ref[0] = _layernorm(q + sa, ln_ref[0:1, :], ln_ref[1:2, :])


def _self_attn_layer(query, query_pos, temp_memory, temp_pos, lp, num_heads,
                     single_buffer):
    bs, nq, D = query.shape
    has_temp = temp_memory is not None
    cdtype = lp["s_wqk"].dtype

    def act_spec(n):
        return pl.BlockSpec((1, n, D), lambda b: (b, 0, 0))

    inputs = [query, query_pos]
    in_specs = [act_spec(nq), act_spec(nq)]
    if has_temp:
        nt = temp_memory.shape[1]
        inputs += [temp_memory, temp_pos]
        in_specs += [act_spec(nt), act_spec(nt)]
    weights = [lp["s_wqk"], lp["s_bqk"], lp["s_wv"], lp["s_bv"],
               lp["s_wo"], lp["s_bo"], lp["ln_sa"]]
    inputs += weights
    in_specs += [_const_spec(w, 1, single_buffer) for w in weights]

    kernel = functools.partial(_self_attn_kernel, num_heads=num_heads,
                               has_temp=has_temp, cdtype=cdtype)

    return pl.pallas_call(
        kernel,
        out_shape=jax.ShapeDtypeStruct((bs, nq, D), jnp.float32),
        grid=(bs,),
        in_specs=in_specs,
        out_specs=act_spec(nq),
        scratch_shapes=[pltpu.VMEM((nq, D), jnp.float32)],
        compiler_params=_compiler_params(("parallel",)),
    )(*inputs)


# ---------------------------------------------------------------------------
# Kernel 2: cross-attention (flash over nk tiles) + LN + FFN + LN + post-norm
# ---------------------------------------------------------------------------

def _cross_ffn_kernel(x1_ref, qp_ref, mem_ref, pe_ref,
                      cw_ref, cb_ref, w1_ref, b1_ref, w2_ref, b2_ref,
                      ln_ref, pn_ref, out_ref, inter_ref,
                      q_scr, m_scr, den_scr, num_scr, *, num_heads, cdtype):
    ki = pl.program_id(2)
    nk_steps = pl.num_programs(2)
    tq, D = q_scr.shape
    hd = D // num_heads
    scale = 1.0 / math.sqrt(hd)

    @pl.when(ki == 0)
    def _init():
        x1 = x1_ref[0]
        qp = qp_ref[0]
        q_in = (x1 + qp).astype(cdtype)
        q_proj = (_mm(q_in, cw_ref[0]) + cb_ref[0:1, :]) * scale  # scale folded
        q_scr[...] = q_proj.astype(cdtype)
        m_scr[...] = jnp.full(m_scr.shape, -jnp.inf, jnp.float32)
        den_scr[...] = jnp.zeros(den_scr.shape, jnp.float32)
        num_scr[...] = jnp.zeros(num_scr.shape, jnp.float32)

    # --- one nk tile: project K/V, streaming online-softmax update per head ---
    mem = mem_ref[0]                               # (tk, D) f32
    pe = pe_ref[0]
    k_proj = (_mm((mem + pe).astype(cdtype), cw_ref[1]) + cb_ref[1:2, :]).astype(cdtype)
    v_proj = (_mm(mem.astype(cdtype), cw_ref[2]) + cb_ref[2:3, :]).astype(cdtype)
    q_all = q_scr[...]

    for h in range(num_heads):
        sl = slice(h * hd, (h + 1) * hd)
        s = lax.dot_general(q_all[:, sl], k_proj[:, sl],
                            (((1,), (1,)), ((), ())),
                            preferred_element_type=jnp.float32)
        m_prev = m_scr[:, h:h + 1]
        m_new = jnp.maximum(m_prev, jnp.max(s, axis=-1, keepdims=True))
        alpha = jnp.exp(m_prev - m_new)
        p = jnp.exp(s - m_new)
        den_scr[:, h:h + 1] = alpha * den_scr[:, h:h + 1] + jnp.sum(
            p, axis=-1, keepdims=True)
        num_scr[:, sl] = alpha * num_scr[:, sl] + _mm(p.astype(cdtype), v_proj[:, sl])
        m_scr[:, h:h + 1] = m_new

    # --- finalize: out-proj, residual+LN, FFN, residual+LN, post-norm ---
    @pl.when(ki == nk_steps - 1)
    def _finalize():
        for h in range(num_heads):
            sl = slice(h * hd, (h + 1) * hd)
            num_scr[:, sl] = num_scr[:, sl] / den_scr[:, h:h + 1]
        ca = _mm(num_scr[...].astype(cdtype), cw_ref[3]) + cb_ref[3:4, :]
        x1 = x1_ref[0]
        x2 = _layernorm(x1 + ca, ln_ref[0:1, :], ln_ref[1:2, :])
        hid = jnp.maximum(_mm(x2.astype(cdtype), w1_ref[...]) + b1_ref[...], 0.0)
        x3 = x2 + _mm(hid.astype(cdtype), w2_ref[...]) + b2_ref[...]
        x3 = _layernorm(x3, ln_ref[2:3, :], ln_ref[3:4, :])
        out_ref[0] = x3
        inter_ref[0] = _layernorm(x3, pn_ref[0:1, :], pn_ref[1:2, :])


def _cross_ffn_layer(x1, query_pos, memory, pos_embed, lp, post_norm, num_heads,
                     tq, tk, single_buffer):
    bs, nq, D = x1.shape
    nk = memory.shape[1]
    cdtype = lp["c_w"].dtype
    n_qt = nq // tq
    n_kt = nk // tk

    def q_spec():
        return pl.BlockSpec((1, tq, D), lambda b, qi, ki: (b, qi, 0))

    def kv_spec():
        return pl.BlockSpec((1, tk, D), lambda b, qi, ki: (b, ki, 0))

    weights = [lp["c_w"], lp["c_b"], lp["ffn_w1"], lp["ffn_b1"],
               lp["ffn_w2"], lp["ffn_b2"], lp["ln_rest"], post_norm]
    inputs = [x1, query_pos, memory, pos_embed] + weights
    in_specs = [q_spec(), q_spec(), kv_spec(), kv_spec()] + \
               [_const_spec(w, 3, single_buffer) for w in weights]

    kernel = functools.partial(_cross_ffn_kernel, num_heads=num_heads,
                               cdtype=cdtype)

    out, inter = pl.pallas_call(
        kernel,
        out_shape=(jax.ShapeDtypeStruct((bs, nq, D), jnp.float32),
                   jax.ShapeDtypeStruct((bs, nq, D), jnp.float32)),
        grid=(bs, n_qt, n_kt),
        in_specs=in_specs,
        out_specs=(q_spec(), q_spec()),
        scratch_shapes=[
            pltpu.VMEM((tq, D), cdtype),                  # scaled Q projection
            pltpu.VMEM((tq, num_heads), jnp.float32),     # running max
            pltpu.VMEM((tq, num_heads), jnp.float32),     # running denom
            pltpu.VMEM((tq, D), jnp.float32),             # running numerator
        ],
        compiler_params=_compiler_params(("parallel", "parallel", "arbitrary")),
    )(*inputs)
    return out, inter


# ---------------------------------------------------------------------------
# Forward (mirrors PETRTemporalTransformer.forward, batch-first layout)
# ---------------------------------------------------------------------------

def petr_temporal_transformer_forward(params, memory, tgt, query_pos, pos_embed,
                                      attn_masks, temp_memory=None, temp_pos=None,
                                      mask=None, query_mask=None,
                                      q_tile=256, kv_tile=512):
    if tgt is None:
        tgt = jnp.zeros_like(query_pos)
    if not isinstance(attn_masks, (list, tuple)):
        attn_masks = [attn_masks]
    assert len(attn_masks) == 2   # self-attn + cross-attn per decoder layer
    # TODO(synk): non-None attn_masks / key_padding_mask / query_mask are not
    # applied inside the fused kernels (only the unmasked PETR path is modeled).
    # TODO(synk): dropout from the PyTorch module is not modeled (inference path).

    bs, nq, D = query_pos.shape
    nk = memory.shape[1]
    H = params["num_heads"]
    tq = _pick_tile(nq, q_tile)       # query tile ("parallel" axis, v7x 2 TCs)
    tk = _pick_tile(nk, kv_tile)      # key tile  (flash "arbitrary" axis)
    single_buffer = _buffered_one_supported()

    query = tgt
    intermediates = []
    for lp in params["layers"]:
        x1 = _self_attn_layer(query, query_pos, temp_memory, temp_pos, lp, H,
                              single_buffer)
        query, inter = _cross_ffn_layer(x1, query_pos, memory, pos_embed, lp,
                                        params["post_norm"], H, tq, tk,
                                        single_buffer)
        intermediates.append(inter)
    out_dec = jnp.stack(intermediates, axis=0)      # (L, bs, nq, D)
    return out_dec, memory


# ---------------------------------------------------------------------------
# Deterministic parameter init (packed layouts; optional bf16 weight storage)
# ---------------------------------------------------------------------------

def _xavier(key, shape):
    limit = math.sqrt(6.0 / (shape[0] + shape[1]))
    return jax.random.uniform(key, shape, jnp.float32, -limit, limit)


def init_params(key, D, H, F, L, use_bf16=False):
    wdtype = jnp.bfloat16 if use_bf16 else jnp.float32
    ones = jnp.ones((1, D), jnp.float32)
    zeros = jnp.zeros((1, D), jnp.float32)
    layers = []
    keys = jax.random.split(key, L)
    for l in range(L):
        ks = jax.random.split(keys[l], 10)
        wq, wk, wv, wo = (_xavier(ks[i], (D, D)) for i in range(4))
        cw = jnp.stack([_xavier(ks[4 + i], (D, D)) for i in range(4)], axis=0)
        layers.append(dict(
            s_wqk=jnp.concatenate([wq, wk], axis=1).astype(wdtype),   # (D, 2D)
            s_bqk=jnp.zeros((1, 2 * D), jnp.float32),
            s_wv=wv.astype(wdtype), s_bv=jnp.zeros((1, D), jnp.float32),
            s_wo=wo.astype(wdtype), s_bo=jnp.zeros((1, D), jnp.float32),
            c_w=cw.astype(wdtype),                                    # [Wq,Wk,Wv,Wo]
            c_b=jnp.zeros((4, D), jnp.float32),
            ffn_w1=_xavier(ks[8], (D, F)).astype(wdtype),
            ffn_b1=jnp.zeros((1, F), jnp.float32),
            ffn_w2=_xavier(ks[9], (F, D)).astype(wdtype),
            ffn_b2=jnp.zeros((1, D), jnp.float32),
            ln_sa=jnp.concatenate([ones, zeros], axis=0),             # LN after self-attn
            ln_rest=jnp.concatenate([ones, zeros, ones, zeros], axis=0),
        ))
    post_norm = jnp.concatenate([ones, zeros], axis=0)
    return dict(layers=layers, post_norm=post_norm, num_heads=H)


# ---------------------------------------------------------------------------
# Main
# ---------------------------------------------------------------------------

if __name__ == "__main__":
    bs, n_q, n_mem, n_temp = 2, 8, 16, 8
    D, H, F, L = 64, 4, 128, 2
    USE_BF16 = True   # bf16 MXU inputs / f32 accumulation; set False for strict
                      # f32 reference-parity validation against PyTorch.

    key = jax.random.PRNGKey(0)
    keys = jax.random.split(key, 6)
    memory = jax.random.normal(keys[0], (bs, n_mem, D), jnp.float32)
    query_pos = jax.random.normal(keys[1], (bs, n_q, D), jnp.float32)
    pos_embed = jax.random.normal(keys[2], (bs, n_mem, D), jnp.float32)
    temp_memory = jax.random.normal(keys[3], (bs, n_temp, D), jnp.float32)
    temp_pos = jax.random.normal(keys[4], (bs, n_temp, D), jnp.float32)
    params = init_params(keys[5], D, H, F, L, use_bf16=USE_BF16)

    out_dec, mem_out = petr_temporal_transformer_forward(
        params, memory, None, query_pos, pos_embed, [None, None],
        temp_memory=temp_memory, temp_pos=temp_pos)

    jax.block_until_ready(out_dec)
    jax.block_until_ready(mem_out)
    assert out_dec.shape == (L, bs, n_q, D)
    assert mem_out.shape == (bs, n_mem, D)
    assert bool(jnp.all(jnp.isfinite(out_dec)))
    print("KERNEL_OK")
</pallas_src>

<mosaic_0001>
module attributes {stable_mosaic.version = 11 : i64} {
  func.func @_k(%arg0: i32, %arg1: memref<8x128xf32, #tpu.memory_space<vmem>>, %arg2: memref<8x128xf32, #tpu.memory_space<vmem>>) attributes {dimension_semantics = [#tpu.dimension_semantics<arbitrary>], iteration_bounds = array<i64: 1>, scalar_prefetch = 0 : i64, scratch_operands = 0 : i64, tpu.core_type = #tpu.core_type<tc>, window_params = [{pipeline_mode = #tpu.pipeline_mode<synchronous>, transform_indices = @transform_0, window_bounds = array<i64: 8, 128>}, {pipeline_mode = #tpu.pipeline_mode<synchronous>, transform_indices = @transform_1, window_bounds = array<i64: 8, 128>}]} {
    %c0 = arith.constant 0 : index
    %c0_0 = arith.constant 0 : index
    %0 = vector.load %arg1[%c0, %c0_0] : memref<8x128xf32, #tpu.memory_space<vmem>>, vector<8x128xf32>
    %cst = arith.constant 1.000000e+00 : f32
    %1 = vector.broadcast %cst : f32 to vector<8x128xf32>
    %2 = arith.addf %0, %1 : vector<8x128xf32>
    %c0_1 = arith.constant 0 : index
    %c0_2 = arith.constant 0 : index
    %3 = vector.load %arg2[%c0_1, %c0_2] : memref<8x128xf32, #tpu.memory_space<vmem>>, vector<8x128xf32>
    tpu.vector_store %arg2[%c0_1, %c0_2], %2 {strides = array<i32>} : memref<8x128xf32, #tpu.memory_space<vmem>>, vector<8x128xf32>,
    return
  }
  func.func @transform_0(%arg0: i32) -> (i32, i32) {
    %c0_i32 = arith.constant 0 : i32
    %c0_i32_0 = arith.constant 0 : i32
    %c0_i32_1 = arith.constant 0 : i32
    return %c0_i32, %c0_i32_0 : i32, i32
  }
  func.func @transform_1(%arg0: i32) -> (i32, i32) {
    %c0_i32 = arith.constant 0 : i32
    %c0_i32_0 = arith.constant 0 : i32
    %c0_i32_1 = arith.constant 0 : i32
    return %c0_i32, %c0_i32_0 : i32, i32
  }
}

module attributes {stable_mosaic.version = 11 : i64} {
  func.func @_self_attn_kernel(%arg0: i32, %arg1: memref<1x8x64xf32, #tpu.memory_space<vmem>>, %arg2: memref<1x8x64xf32, #tpu.memory_space<vmem>>, %arg3: memref<1x8x64xf32, #tpu.memory_space<vmem>>, %arg4: memref<1x8x64xf32, #tpu.memory_space<vmem>>, %arg5: memref<64x128xbf16, #tpu.memory_space<vmem>>, %arg6: memref<1x128xf32, #tpu.memory_space<vmem>>, %arg7: memref<64x64xbf16, #tpu.memory_space<vmem>>, %arg8: memref<1x64xf32, #tpu.memory_space<vmem>>, %arg9: memref<64x64xbf16, #tpu.memory_space<vmem>>, %arg10: memref<1x64xf32, #tpu.memory_space<vmem>>, %arg11: memref<2x64xf32, #tpu.memory_space<vmem>>, %arg12: memref<1x8x64xf32, #tpu.memory_space<vmem>>, %arg13: memref<8x64xf32, #tpu.memory_space<vmem>>) attributes {dimension_semantics = [#tpu.dimension_semantics<parallel>], iteration_bounds = array<i64: 2>, scalar_prefetch = 0 : i64, scratch_operands = 1 : i64, tpu.core_type = #tpu.core_type<tc>, window_params = [{transform_indices = @transform_0, window_bounds = array<i64: 1, 8, 64>}, {transform_indices = @transform_1, window_bounds = array<i64: 1, 8, 64>}, {transform_indices = @transform_2, window_bounds = array<i64: 1, 8, 64>}, {transform_indices = @transform_3, window_bounds = array<i64: 1, 8, 64>}, {pipeline_mode = #tpu.pipeline_mode<synchronous>, transform_indices = @transform_4, window_bounds = array<i64: 64, 128>}, {pipeline_mode = #tpu.pipeline_mode<synchronous>, transform_indices = @transform_5, window_bounds = array<i64: 1, 128>}, {pipeline_mode = #tpu.pipeline_mode<synchronous>, transform_indices = @transform_6, window_bounds = array<i64: 64, 64>}, {pipeline_mode = #tpu.pipeline_mode<synchronous>, transform_indices = @transform_7, window_bounds = array<i64: 1, 64>}, {pipeline_mode = #tpu.pipeline_mode<synchronous>, transform_indices = @transform_8, window_bounds = array<i64: 64, 64>}, {pipeline_mode = #tpu.pipeline_mode<synchronous>, transform_indices = @transform_9, window_bounds = array<i64: 1, 64>}, {pipeline_mode = #tpu.pipeline_mode<synchronous>, transform_indices = @transform_10, window_bounds = array<i64: 2, 64>}, {transform_indices = @transform_11, window_bounds = array<i64: 1, 8, 64>}]} {
    %c0 = arith.constant 0 : index
    %c0_0 = arith.constant 0 : index
    %c0_1 = arith.constant 0 : index
    %0 = vector.load %arg1[%c0, %c0_0, %c0_1] : memref<1x8x64xf32, #tpu.memory_space<vmem>>, vector<1x8x64xf32>
    %1 = vector.shape_cast %0 : vector<1x8x64xf32> to vector<8x64xf32>
    %c0_2 = arith.constant 0 : index
    %c0_3 = arith.constant 0 : index
    %c0_4 = arith.constant 0 : index
    %2 = vector.load %arg2[%c0_2, %c0_3, %c0_4] : memref<1x8x64xf32, #tpu.memory_space<vmem>>, vector<1x8x64xf32>
    %3 = vector.shape_cast %2 : vector<1x8x64xf32> to vector<8x64xf32>
    %c0_5 = arith.constant 0 : index
    %c0_6 = arith.constant 0 : index
    %4 = vector.load %arg5[%c0_5, %c0_6] : memref<64x128xbf16, #tpu.memory_space<vmem>>, vector<64x128xbf16>
    %c0_7 = arith.constant 0 : index
    %c0_8 = arith.constant 0 : index
    %5 = vector.load %arg6[%c0_7, %c0_8] : memref<1x128xf32, #tpu.memory_space<vmem>>, vector<1x128xf32>
    %6 = arith.addf %1, %3 : vector<8x64xf32>
    %7 = arith.truncf %6 : vector<8x64xf32> to vector<8x64xbf16>
    %cst = arith.constant dense<0.000000e+00> : vector<8x128xf32>
    %8 = tpu.matmul %7, %4, %cst {dimension_numbers = #tpu.dot_dimension_numbers<[1], [0], [0], [1], [0, 0, 1, 1], [], []>} : vector<8x64xbf16>, vector<64x128xbf16>, vector<8x128xf32> -> vector<8x128xf32>
    %9 = vector.broadcast %5 : vector<1x128xf32> to vector<8x128xf32>
    %10 = arith.addf %8, %9 : vector<8x128xf32>
    %11 = vector.extract_strided_slice %10 {offsets = [0, 0], sizes = [8, 64], strides = [1, 1]} : vector<8x128xf32> to vector<8x64xf32>
    %cst_9 = arith.constant 2.500000e-01 : f32
    %12 = vector.broadcast %cst_9 : f32 to vector<8x64xf32>
    %13 = arith.mulf %11, %12 : vector<8x64xf32>
    %14 = arith.truncf %13 : vector<8x64xf32> to vector<8x64xbf16>
    %15 = vector.extract_strided_slice %10 {offsets = [0, 64], sizes = [8, 64], strides = [1, 1]} : vector<8x128xf32> to vector<8x64xf32>
    %16 = arith.truncf %15 : vector<8x64xf32> to vector<8x64xbf16>
    %17 = arith.truncf %1 : vector<8x64xf32> to vector<8x64xbf16>
    %c0_10 = arith.constant 0 : index
    %c0_11 = arith.constant 0 : index
    %18 = vector.load %arg7[%c0_10, %c0_11] : memref<64x64xbf16, #tpu.memory_space<vmem>>, vector<64x64xbf16>
    %cst_12 = arith.constant dense<0.000000e+00> : vector<8x64xf32>
    %19 = tpu.matmul %17, %18, %cst_12 {dimension_numbers = #tpu.dot_dimension_numbers<[1], [0], [0], [1], [0, 0, 1, 1], [], []>} : vector<8x64xbf16>, vector<64x64xbf16>, vector<8x64xf32> -> vector<8x64xf32>
    %c0_13 = arith.constant 0 : index
    %c0_14 = arith.constant 0 : index
    %20 = vector.load %arg8[%c0_13, %c0_14] : memref<1x64xf32, #tpu.memory_space<vmem>>, vector<1x64xf32>
    %21 = vector.broadcast %20 : vector<1x64xf32> to vector<8x64xf32>
    %22 = arith.addf %19, %21 : vector<8x64xf32>
    %23 = arith.truncf %22 : vector<8x64xf32> to vector<8x64xbf16>
    %c0_15 = arith.constant 0 : index
    %c0_16 = arith.constant 0 : index
    %c0_17 = arith.constant 0 : index
    %24 = vector.load %arg3[%c0_15, %c0_16, %c0_17] : memref<1x8x64xf32, #tpu.memory_space<vmem>>, vector<1x8x64xf32>
    %25 = vector.shape_cast %24 : vector<1x8x64xf32> to vector<8x64xf32>
    %c0_18 = arith.constant 0 : index
    %c0_19 = arith.constant 0 : index
    %c0_20 = arith.constant 0 : index
    %26 = vector.load %arg4[%c0_18, %c0_19, %c0_20] : memref<1x8x64xf32, #tpu.memory_space<vmem>>, vector<1x8x64xf32>
    %27 = vector.shape_cast %26 : vector<1x8x64xf32> to vector<8x64xf32>
    %28 = vector.extract_strided_slice %4 {offsets = [0, 64], sizes = [64, 64], strides = [1, 1]} : vector<64x128xbf16> to vector<64x64xbf16>
    %29 = arith.addf %25, %27 : vector<8x64xf32>
    %30 = arith.truncf %29 : vector<8x64xf32> to vector<8x64xbf16>
    %cst_21 = arith.constant dense<0.000000e+00> : vector<8x64xf32>
    %31 = tpu.matmul %30, %28, %cst_21 {dimension_numbers = #tpu.dot_dimension_numbers<[1], [0], [0], [1], [0, 0, 1, 1], [], []>} : vector<8x64xbf16>, vector<64x64xbf16>, vector<8x64xf32> -> vector<8x64xf32>
    %32 = vector.extract_strided_slice %5 {offsets = [0, 64], sizes = [1, 64], strides = [1, 1]} : vector<1x128xf32> to vector<1x64xf32>
    %33 = vector.broadcast %32 : vector<1x64xf32> to vector<8x64xf32>
    %34 = arith.addf %31, %33 : vector<8x64xf32>
    %35 = arith.truncf %34 : vector<8x64xf32> to vector<8x64xbf16>
    %36 = arith.truncf %25 : vector<8x64xf32> to vector<8x64xbf16>
    %c0_22 = arith.constant 0 : index
    %c0_23 = arith.constant 0 : index
    %37 = vector.load %arg7[%c0_22, %c0_23] : memref<64x64xbf16, #tpu.memory_space<vmem>>, vector<64x64xbf16>
    %cst_24 = arith.constant dense<0.000000e+00> : vector<8x64xf32>
    %38 = tpu.matmul %36, %37, %cst_24 {dimension_numbers = #tpu.dot_dimension_numbers<[1], [0], [0], [1], [0, 0, 1, 1], [], []>} : vector<8x64xbf16>, vector<64x64xbf16>, vector<8x64xf32> -> vector<8x64xf32>
    %c0_25 = arith.constant 0 : index
    %c0_26 = arith.constant 0 : index
    %39 = vector.load %arg8[%c0_25, %c0_26] : memref<1x64xf32, #tpu.memory_space<vmem>>, vector<1x64xf32>
    %40 = vector.broadcast %39 : vector<1x64xf32> to vector<8x64xf32>
    %41 = arith.addf %38, %40 : vector<8x64xf32>
    %42 = arith.truncf %41 : vector<8x64xf32> to vector<8x64xbf16>
    %43 = vector.extract_strided_slice %14 {offsets = [0, 0], sizes = [8, 16], strides = [1, 1]} : vector<8x64xbf16> to vector<8x16xbf16>
    %44 = vector.extract_strided_slice %16 {offsets = [0, 0], sizes = [8, 16], strides = [1, 1]} : vector<8x64xbf16> to vector<8x16xbf16>
    %cst_27 = arith.constant dense<0.000000e+00> : vector<8x8xf32>
    %45 = tpu.matmul %43, %44, %cst_27 {dimension_numbers = #tpu.dot_dimension_numbers<[1], [1], [0], [0], [0, 0, 1, 0], [], []>} : vector<8x16xbf16>, vector<8x16xbf16>, vector<8x8xf32> -> vector<8x8xf32>
    %cst_28 = arith.constant dense<0xFF800000> : vector<8xf32>
    %46 = vector.multi_reduction <maximumf>, %45, %cst_28 [1] : vector<8x8xf32> to vector<8xf32>
    %47 = vector.shape_cast %46 : vector<8xf32> to vector<8x1xf32>
    %48 = vector.broadcast %47 : vector<8x1xf32> to vector<8x8xf32>
    %49 = arith.subf %45, %48 : vector<8x8xf32>
    %50 = math.exp %49 : vector<8x8xf32>
    %cst_29 = arith.constant dense<0.000000e+00> : vector<8xf32>
    %51 = vector.multi_reduction <add>, %50, %cst_29 [1] : vector<8x8xf32> to vector<8xf32>
    %52 = vector.shape_cast %51 : vector<8xf32> to vector<8x1xf32>
    %53 = arith.truncf %50 : vector<8x8xf32> to vector<8x8xbf16>
    %54 = vector.extract_strided_slice %23 {offsets = [0, 0], sizes = [8, 16], strides = [1, 1]} : vector<8x64xbf16> to vector<8x16xbf16>
    %cst_30 = arith.constant dense<0.000000e+00> : vector<8x16xf32>
    %55 = tpu.matmul %53, %54, %cst_30 {dimension_numbers = #tpu.dot_dimension_numbers<[1], [0], [0], [1], [0, 0, 1, 1], [], []>} : vector<8x8xbf16>, vector<8x16xbf16>, vector<8x16xf32> -> vector<8x16xf32>
    %56 = vector.extract_strided_slice %35 {offsets = [0, 0], sizes = [8, 16], strides = [1, 1]} : vector<8x64xbf16> to vector<8x16xbf16>
    %cst_31 = arith.constant dense<0.000000e+00> : vector<8x8xf32>
    %57 = tpu.matmul %43, %56, %cst_31 {dimension_numbers = #tpu.dot_dimension_numbers<[1], [1], [0], [0], [0, 0, 1, 0], [], []>} : vector<8x16xbf16>, vector<8x16xbf16>, vector<8x8xf32> -> vector<8x8xf32>
    %cst_32 = arith.constant dense<0xFF800000> : vector<8xf32>
    %58 = vector.multi_reduction <maximumf>, %57, %cst_32 [1] : vector<8x8xf32> to vector<8xf32>
    %59 = vector.shape_cast %58 : vector<8xf32> to vector<8x1xf32>
    %60 = arith.maximumf %47, %59 : vector<8x1xf32>
    %61 = arith.subf %47, %60 : vector<8x1xf32>
    %62 = math.exp %61 : vector<8x1xf32>
    %63 = vector.broadcast %60 : vector<8x1xf32> to vector<8x8xf32>
    %64 = arith.subf %57, %63 : vector<8x8xf32>
    %65 = math.exp %64 : vector<8x8xf32>
    %66 = arith.mulf %62, %52 : vector<8x1xf32>
    %cst_33 = arith.constant dense<0.000000e+00> : vector<8xf32>
    %67 = vector.multi_reduction <add>, %65, %cst_33 [1] : vector<8x8xf32> to vector<8xf32>
    %68 = vector.shape_cast %67 : vector<8xf32> to vector<8x1xf32>
    %69 = arith.addf %66, %68 : vector<8x1xf32>
    %70 = vector.broadcast %62 : vector<8x1xf32> to vector<8x16xf32>
    %71 = arith.mulf %70, %55 : vector<8x16xf32>
    %72 = arith.truncf %65 : vector<8x8xf32> to vector<8x8xbf16>
    %73 = vector.extract_strided_slice %42 {offsets = [0, 0], sizes = [8, 16], strides = [1, 1]} : vector<8x64xbf16> to vector<8x16xbf16>
    %cst_34 = arith.constant dense<0.000000e+00> : vector<8x16xf32>
    %74 = tpu.matmul %72, %73, %cst_34 {dimension_numbers = #tpu.dot_dimension_numbers<[1], [0], [0], [1], [0, 0, 1, 1], [], []>} : vector<8x8xbf16>, vector<8x16xbf16>, vector<8x16xf32> -> vector<8x16xf32>
    %75 = arith.addf %71, %74 : vector<8x16xf32>
    %76 = vector.broadcast %69 : vector<8x1xf32> to vector<8x16xf32>
    %77 = arith.divf %75, %76 : vector<8x16xf32>
    %c0_35 = arith.constant 0 : index
    %c0_36 = arith.constant 0 : index
    %78 = vector.load %arg13[%c0_35, %c0_36] : memref<8x64xf32, #tpu.memory_space<vmem>>, vector<8x16xf32>
    tpu.vector_store %arg13[%c0_35, %c0_36], %77 {strides = array<i32>} : memref<8x64xf32, #tpu.memory_space<vmem>>, vector<8x16xf32>,
    %79 = vector.extract_strided_slice %14 {offsets = [0, 16], sizes = [8, 16], strides = [1, 1]} : vector<8x64xbf16> to vector<8x16xbf16>
    %80 = vector.extract_strided_slice %16 {offsets = [0, 16], sizes = [8, 16], strides = [1, 1]} : vector<8x64xbf16> to vector<8x16xbf16>
    %cst_37 = arith.constant dense<0.000000e+00> : vector<8x8xf32>
    %81 = tpu.matmul %79, %80, %cst_37 {dimension_numbers = #tpu.dot_dimension_numbers<[1], [1], [0], [0], [0, 0, 1, 0], [], []>} : vector<8x16xbf16>, vector<8x16xbf16>, vector<8x8xf32> -> vector<8x8xf32>
    %cst_38 = arith.constant dense<0xFF800000> : vector<8xf32>
    %82 = vector.multi_reduction <maximumf>, %81, %cst_38 [1] : vector<8x8xf32> to vector<8xf32>
    %83 = vector.shape_cast %82 : vector<8xf32> to vector<8x1xf32>
    %84 = vector.broadcast %83 : vector<8x1xf32> to vector<8x8xf32>
    %85 = arith.subf %81, %84 : vector<8x8xf32>
    %86 = math.exp %85 : vector<8x8xf32>
    %cst_39 = arith.constant dense<0.000000e+00> : vector<8xf32>
    %87 = vector.multi_reduction <add>, %86, %cst_39 [1] : vector<8x8xf32> to vector<8xf32>
    %88 = vector.shape_cast %87 : vector<8xf32> to vector<8x1xf32>
    %89 = arith.truncf %86 : vector<8x8xf32> to vector<8x8xbf16>
    %90 = vector.extract_strided_slice %23 {offsets = [0, 16], sizes = [8, 16], strides = [1, 1]} : vector<8x64xbf16> to vector<8x16xbf16>
    %cst_40 = arith.constant dense<0.000000e+00> : vector<8x16xf32>
    %91 = tpu.matmul %89, %90, %cst_40 {dimension_numbers = #tpu.dot_dimension_numbers<[1], [0], [0], [1], [0, 0, 1, 1], [], []>} : vector<8x8xbf16>, vector<8x16xbf16>, vector<8x16xf32> -> vector<8x16xf32>
    %92 = vector.extract_strided_slice %35 {offsets = [0, 16], sizes = [8, 16], strides = [1, 1]} : vector<8x64xbf16> to vector<8x16xbf16>
    %cst_41 = arith.constant dense<0.000000e+00> : vector<8x8xf32>
    %93 = tpu.matmul %79, %92, %cst_41 {dimension_numbers = #tpu.dot_dimension_numbers<[1], [1], [0], [0], [0, 0, 1, 0], [], []>} : vector<8x16xbf16>, vector<8x16xbf16>, vector<8x8xf32> -> vector<8x8xf32>
    %cst_42 = arith.constant dense<0xFF800000> : vector<8xf32>
    %94 = vector.multi_reduction <maximumf>, %93, %cst_42 [1] : vector<8x8xf32> to vector<8xf32>
    %95 = vector.shape_cast %94 : vector<8xf32> to vector<8x1xf32>
    %96 = arith.maximumf %83, %95 : vector<8x1xf32>
    %97 = arith.subf %83, %96 : vector<8x1xf32>
    %98 = math.exp %97 : vector<8x1xf32>
    %99 = vector.broadcast %96 : vector<8x1xf32> to vector<8x8xf32>
    %100 = arith.subf %93, %99 : vector<8x8xf32>
    %101 = math.exp %100 : vector<8x8xf32>
    %102 = arith.mulf %98, %88 : vector<8x1xf32>
    %cst_43 = arith.constant dense<0.000000e+00> : vector<8xf32>
    %103 = vector.multi_reduction <add>, %101, %cst_43 [1] : vector<8x8xf32> to vector<8xf32>
    %104 = vector.shape_cast %103 : vector<8xf32> to vector<8x1xf32>
    %105 = arith.addf %102, %104 : vector<8x1xf32>
    %106 = vector.broadcast %98 : vector<8x1xf32> to vector<8x16xf32>
    %107 = arith.mulf %106, %91 : vector<8x16xf32>
    %108 = arith.truncf %101 : vector<8x8xf32> to vector<8x8xbf16>
    %109 = vector.extract_strided_slice %42 {offsets = [0, 16], sizes = [8, 16], strides = [1, 1]} : vector<8x64xbf16> to vector<8x16xbf16>
    %cst_44 = arith.constant dense<0.000000e+00> : vector<8x16xf32>
    %110 = tpu.matmul %108, %109, %cst_44 {dimension_numbers = #tpu.dot_dimension_numbers<[1], [0], [0], [1], [0, 0, 1, 1], [], []>} : vector<8x8xbf16>, vector<8x16xbf16>, vector<8x16xf32> -> vector<8x16xf32>
    %111 = arith.addf %107, %110 : vector<8x16xf32>
    %112 = vector.broadcast %105 : vector<8x1xf32> to vector<8x16xf32>
    %113 = arith.divf %111, %112 : vector<8x16xf32>
    %c0_45 = arith.constant 0 : index
    %c16 = arith.constant 16 : index
    %114 = vector.load %arg13[%c0_45, %c16] : memref<8x64xf32, #tpu.memory_space<vmem>>, vector<8x16xf32>
    tpu.vector_store %arg13[%c0_45, %c16], %113 {strides = array<i32>} : memref<8x64xf32, #tpu.memory_space<vmem>>, vector<8x16xf32>,
    %115 = vector.extract_strided_slice %14 {offsets = [0, 32], sizes = [8, 16], strides = [1, 1]} : vector<8x64xbf16> to vector<8x16xbf16>
    %116 = vector.extract_strided_slice %16 {offsets = [0, 32], sizes = [8, 16], strides = [1, 1]} : vector<8x64xbf16> to vector<8x16xbf16>
    %cst_46 = arith.constant dense<0.000000e+00> : vector<8x8xf32>
    %117 = tpu.matmul %115, %116, %cst_46 {dimension_numbers = #tpu.dot_dimension_numbers<[1], [1], [0], [0], [0, 0, 1, 0], [], []>} : vector<8x16xbf16>, vector<8x16xbf16>, vector<8x8xf32> -> vector<8x8xf32>
    %cst_47 = arith.constant dense<0xFF800000> : vector<8xf32>
    %118 = vector.multi_reduction <maximumf>, %117, %cst_47 [1] : vector<8x8xf32> to vector<8xf32>
    %119 = vector.shape_cast %118 : vector<8xf32> to vector<8x1xf32>
    %120 = vector.broadcast %119 : vector<8x1xf32> to vector<8x8xf32>
    %121 = arith.subf %117, %120 : vector<8x8xf32>
    %122 = math.exp %121 : vector<8x8xf32>
    %cst_48 = arith.constant dense<0.000000e+00> : vector<8xf32>
    %123 = vector.multi_reduction <add>, %122, %cst_48 [1] : vector<8x8xf32> to vector<8xf32>
    %124 = vector.shape_cast %123 : vector<8xf32> to vector<8x1xf32>
    %125 = arith.truncf %122 : vector<8x8xf32> to vector<8x8xbf16>
    %126 = vector.extract_strided_slice %23 {offsets = [0, 32], sizes = [8, 16], strides = [1, 1]} : vector<8x64xbf16> to vector<8x16xbf16>
    %cst_49 = arith.constant dense<0.000000e+00> : vector<8x16xf32>
    %127 = tpu.matmul %125, %126, %cst_49 {dimension_numbers = #tpu.dot_dimension_numbers<[1], [0], [0], [1], [0, 0, 1, 1], [], []>} : vector<8x8xbf16>, vector<8x16xbf16>, vector<8x16xf32> -> vector<8x16xf32>
    %128 = vector.extract_strided_slice %35 {offsets = [0, 32], sizes = [8, 16], strides = [1, 1]} : vector<8x64xbf16> to vector<8x16xbf16>
    %cst_50 = arith.constant dense<0.000000e+00> : vector<8x8xf32>
    %129 = tpu.matmul %115, %128, %cst_50 {dimension_numbers = #tpu.dot_dimension_numbers<[1], [1], [0], [0], [0, 0, 1, 0], [], []>} : vector<8x16xbf16>, vector<8x16xbf16>, vector<8x8xf32> -> vector<8x8xf32>
    %cst_51 = arith.constant dense<0xFF800000> : vector<8xf32>
    %130 = vector.multi_reduction <maximumf>, %129, %cst_51 [1] : vector<8x8xf32> to vector<8xf32>
    %131 = vector.shape_cast %130 : vector<8xf32> to vector<8x1xf32>
    %132 = arith.maximumf %119, %131 : vector<8x1xf32>
    %133 = arith.subf %119, %132 : vector<8x1xf32>
    %134 = math.exp %133 : vector<8x1xf32>
    %135 = vector.broadcast %132 : vector<8x1xf32> to vector<8x8xf32>
    %136 = arith.subf %129, %135 : vector<8x8xf32>
    %137 = math.exp %136 : vector<8x8xf32>
    %138 = arith.mulf %134, %124 : vector<8x1xf32>
    %cst_52 = arith.constant dense<0.000000e+00> : vector<8xf32>
    %139 = vector.multi_reduction <add>, %137, %cst_52 [1] : vector<8x8xf32> to vector<8xf32>
    %140 = vector.shape_cast %139 : vector<8xf32> to vector<8x1xf32>
    %141 = arith.addf %138, %140 : vector<8x1xf32>
    %142 = vector.broadcast %134 : vector<8x1xf32> to vector<8x16xf32>
    %143 = arith.mulf %142, %127 : vector<8x16xf32>
    %144 = arith.truncf %137 : vector<8x8xf32> to vector<8x8xbf16>
    %145 = vector.extract_strided_slice %42 {offsets = [0, 32], sizes = [8, 16], strides = [1, 1]} : vector<8x64xbf16> to vector<8x16xbf16>
    %cst_53 = arith.constant dense<0.000000e+00> : vector<8x16xf32>
    %146 = tpu.matmul %144, %145, %cst_53 {dimension_numbers = #tpu.dot_dimension_numbers<[1], [0], [0], [1], [0, 0, 1, 1], [], []>} : vector<8x8xbf16>, vector<8x16xbf16>, vector<8x16xf32> -> vector<8x16xf32>
    %147 = arith.addf %143, %146 : vector<8x16xf32>
    %148 = vector.broadcast %141 : vector<8x1xf32> to vector<8x16xf32>
    %149 = arith.divf %147, %148 : vector<8x16xf32>
    %c0_54 = arith.constant 0 : index
    %c32 = arith.constant 32 : index
    %150 = vector.load %arg13[%c0_54, %c32] : memref<8x64xf32, #tpu.memory_space<vmem>>, vector<8x16xf32>
    tpu.vector_store %arg13[%c0_54, %c32], %149 {strides = array<i32>} : memref<8x64xf32, #tpu.memory_space<vmem>>, vector<8x16xf32>,
    %151 = vector.extract_strided_slice %14 {offsets = [0, 48], sizes = [8, 16], strides = [1, 1]} : vector<8x64xbf16> to vector<8x16xbf16>
    %152 = vector.extract_strided_slice %16 {offsets = [0, 48], sizes = [8, 16], strides = [1, 1]} : vector<8x64xbf16> to vector<8x16xbf16>
    %cst_55 = arith.constant dense<0.000000e+00> : vector<8x8xf32>
    %153 = tpu.matmul %151, %152, %cst_55 {dimension_numbers = #tpu.dot_dimension_numbers<[1], [1], [0], [0], [0, 0, 1, 0], [], []>} : vector<8x16xbf16>, vector<8x16xbf16>, vector<8x8xf32> -> vector<8x8xf32>
    %cst_56 = arith.constant dense<0xFF800000> : vector<8xf32>
    %154 = vector.multi_reduction <maximumf>, %153, %cst_56 [1] : vector<8x8xf32> to vector<8xf32>
    %155 = vector.shape_cast %154 : vector<8xf32> to vector<8x1xf32>
    %156 = vector.broadcast %155 : vector<8x1xf32> to vector<8x8xf32>
    %157 = arith.subf %153, %156 : vector<8x8xf32>
    %158 = math.exp %157 : vector<8x8xf32>
    %cst_57 = arith.constant dense<0.000000e+00> : vector<8xf32>
    %159 = vector.multi_reduction <add>, %158, %cst_57 [1] : vector<8x8xf32> to vector<8xf32>
    %160 = vector.shape_cast %159 : vector<8xf32> to vector<8x1xf32>
    %161 = arith.truncf %158 : vector<8x8xf32> to vector<8x8xbf16>
    %162 = vector.extract_strided_slice %23 {offsets = [0, 48], sizes = [8, 16], strides = [1, 1]} : vector<8x64xbf16> to vector<8x16xbf16>
    %cst_58 = arith.constant dense<0.000000e+00> : vector<8x16xf32>
    %163 = tpu.matmul %161, %162, %cst_58 {dimension_numbers = #tpu.dot_dimension_numbers<[1], [0], [0], [1], [0, 0, 1, 1], [], []>} : vector<8x8xbf16>, vector<8x16xbf16>, vector<8x16xf32> -> vector<8x16xf32>
    %164 = vector.extract_strided_slice %35 {offsets = [0, 48], sizes = [8, 16], strides = [1, 1]} : vector<8x64xbf16> to vector<8x16xbf16>
    %cst_59 = arith.constant dense<0.000000e+00> : vector<8x8xf32>
    %165 = tpu.matmul %151, %164, %cst_59 {dimension_numbers = #tpu.dot_dimension_numbers<[1], [1], [0], [0], [0, 0, 1, 0], [], []>} : vector<8x16xbf16>, vector<8x16xbf16>, vector<8x8xf32> -> vector<8x8xf32>
    %cst_60 = arith.constant dense<0xFF800000> : vector<8xf32>
    %166 = vector.multi_reduction <maximumf>, %165, %cst_60 [1] : vector<8x8xf32> to vector<8xf32>
    %167 = vector.shape_cast %166 : vector<8xf32> to vector<8x1xf32>
    %168 = arith.maximumf %155, %167 : vector<8x1xf32>
    %169 = arith.subf %155, %168 : vector<8x1xf32>
    %170 = math.exp %169 : vector<8x1xf32>
    %171 = vector.broadcast %168 : vector<8x1xf32> to vector<8x8xf32>
    %172 = arith.subf %165, %171 : vector<8x8xf32>
    %173 = math.exp %172 : vector<8x8xf32>
    %174 = arith.mulf %170, %160 : vector<8x1xf32>
    %cst_61 = arith.constant dense<0.000000e+00> : vector<8xf32>
    %175 = vector.multi_reduction <add>, %173, %cst_61 [1] : vector<8x8xf32> to vector<8xf32>
    %176 = vector.shape_cast %175 : vector<8xf32> to vector<8x1xf32>
    %177 = arith.addf %174, %176 : vector<8x1xf32>
    %178 = vector.broadcast %170 : vector<8x1xf32> to vector<8x16xf32>
    %179 = arith.mulf %178, %163 : vector<8x16xf32>
    %180 = arith.truncf %173 : vector<8x8xf32> to vector<8x8xbf16>
    %181 = vector.extract_strided_slice %42 {offsets = [0, 48], sizes = [8, 16], strides = [1, 1]} : vector<8x64xbf16> to vector<8x16xbf16>
    %cst_62 = arith.constant dense<0.000000e+00> : vector<8x16xf32>
    %182 = tpu.matmul %180, %181, %cst_62 {dimension_numbers = #tpu.dot_dimension_numbers<[1], [0], [0], [1], [0, 0, 1, 1], [], []>} : vector<8x8xbf16>, vector<8x16xbf16>, vector<8x16xf32> -> vector<8x16xf32>
    %183 = arith.addf %179, %182 : vector<8x16xf32>
    %184 = vector.broadcast %177 : vector<8x1xf32> to vector<8x16xf32>
    %185 = arith.divf %183, %184 : vector<8x16xf32>
    %c0_63 = arith.constant 0 : index
    %c48 = arith.constant 48 : index
    %186 = vector.load %arg13[%c0_63, %c48] : memref<8x64xf32, #tpu.memory_space<vmem>>, vector<8x16xf32>
    tpu.vector_store %arg13[%c0_63, %c48], %185 {strides = array<i32>} : memref<8x64xf32, #tpu.memory_space<vmem>>, vector<8x16xf32>,
    %c0_64 = arith.constant 0 : index
    %c0_65 = arith.constant 0 : index
    %187 = vector.load %arg13[%c0_64, %c0_65] : memref<8x64xf32, #tpu.memory_space<vmem>>, vector<8x64xf32>
    %188 = arith.truncf %187 : vector<8x64xf32> to vector<8x64xbf16>
    %c0_66 = arith.constant 0 : index
    %c0_67 = arith.constant 0 : index
    %189 = vector.load %arg9[%c0_66, %c0_67] : memref<64x64xbf16, #tpu.memory_space<vmem>>, vector<64x64xbf16>
    %cst_68 = arith.constant dense<0.000000e+00> : vector<8x64xf32>
    %190 = tpu.matmul %188, %189, %cst_68 {dimension_numbers = #tpu.dot_dimension_numbers<[1], [0], [0], [1], [0, 0, 1, 1], [], []>} : vector<8x64xbf16>, vector<64x64xbf16>, vector<8x64xf32> -> vector<8x64xf32>
    %c0_69 = arith.constant 0 : index
    %c0_70 = arith.constant 0 : index
    %191 = vector.load %arg10[%c0_69, %c0_70] : memref<1x64xf32, #tpu.memory_space<vmem>>, vector<1x64xf32>
    %192 = vector.broadcast %191 : vector<1x64xf32> to vector<8x64xf32>
    %193 = arith.addf %190, %192 : vector<8x64xf32>
    %194 = arith.addf %1, %193 : vector<8x64xf32>
    %c0_71 = arith.constant 0 : index
    %c0_72 = arith.constant 0 : index
    %195 = vector.load %arg11[%c0_71, %c0_72] : memref<2x64xf32, #tpu.memory_space<vmem>>, vector<1x64xf32>
    %c1 = arith.constant 1 : index
    %c0_73 = arith.constant 0 : index
    %196 = vector.load %arg11[%c1, %c0_73] : memref<2x64xf32, #tpu.memory_space<vmem>>, vector<1x64xf32>
    %cst_74 = arith.constant dense<0.000000e+00> : vector<8xf32>
    %197 = vector.multi_reduction <add>, %194, %cst_74 [1] : vector<8x64xf32> to vector<8xf32>
    %198 = vector.shape_cast %197 : vector<8xf32> to vector<8x1xf32>
    %cst_75 = arith.constant 6.400000e+01 : f32
    %199 = vector.broadcast %cst_75 : f32 to vector<8x1xf32>
    %200 = arith.divf %198, %199 : vector<8x1xf32>
    %201 = vector.broadcast %200 : vector<8x1xf32> to vector<8x64xf32>
    %202 = arith.subf %194, %201 : vector<8x64xf32>
    %203 = arith.mulf %202, %202 : vector<8x64xf32>
    %cst_76 = arith.constant dense<0.000000e+00> : vector<8xf32>
    %204 = vector.multi_reduction <add>, %203, %cst_76 [1] : vector<8x64xf32> to vector<8xf32>
    %205 = vector.shape_cast %204 : vector<8xf32> to vector<8x1xf32>
    %cst_77 = arith.constant 6.400000e+01 : f32
    %206 = vector.broadcast %cst_77 : f32 to vector<8x1xf32>
    %207 = arith.divf %205, %206 : vector<8x1xf32>
    %cst_78 = arith.constant 9.99999974E-6 : f32
    %208 = vector.broadcast %cst_78 : f32 to vector<8x1xf32>
    %209 = arith.addf %207, %208 : vector<8x1xf32>
    %210 = math.rsqrt %209 : vector<8x1xf32>
    %211 = vector.broadcast %210 : vector<8x1xf32> to vector<8x64xf32>
    %212 = arith.mulf %202, %211 : vector<8x64xf32>
    %213 = vector.broadcast %195 : vector<1x64xf32> to vector<8x64xf32>
    %214 = arith.mulf %212, %213 : vector<8x64xf32>
    %215 = vector.broadcast %196 : vector<1x64xf32> to vector<8x64xf32>
    %216 = arith.addf %214, %215 : vector<8x64xf32>
    %c0_79 = arith.constant 0 : index
    %c0_80 = arith.constant 0 : index
    %c0_81 = arith.constant 0 : index
    %217 = vector.load %arg12[%c0_79, %c0_80, %c0_81] : memref<1x8x64xf32, #tpu.memory_space<vmem>>, vector<1x8x64xf32>
    %218 = vector.shape_cast %217 : vector<1x8x64xf32> to vector<8x64xf32>
    %219 = vector.shape_cast %216 : vector<8x64xf32> to vector<1x8x64xf32>
    tpu.vector_store %arg12[%c0_79, %c0_80, %c0_81], %219 {strides = array<i32>} : memref<1x8x64xf32, #tpu.memory_space<vmem>>, vector<1x8x64xf32>,
    return
  }
  func.func @transform_0(%arg0: i32) -> (i32, i32, i32) {
    %c0_i32 = arith.constant 0 : i32
    %c0_i32_0 = arith.constant 0 : i32
    %c0_i32_1 = arith.constant 0 : i32
    return %arg0, %c0_i32, %c0_i32_0 : i32, i32, i32
  }
  func.func @transform_1(%arg0: i32) -> (i32, i32, i32) {
    %c0_i32 = arith.constant 0 : i32
    %c0_i32_0 = arith.constant 0 : i32
    %c0_i32_1 = arith.constant 0 : i32
    return %arg0, %c0_i32, %c0_i32_0 : i32, i32, i32
  }
  func.func @transform_2(%arg0: i32) -> (i32, i32, i32) {
    %c0_i32 = arith.constant 0 : i32
    %c0_i32_0 = arith.constant 0 : i32
    %c0_i32_1 = arith.constant 0 : i32
    return %arg0, %c0_i32, %c0_i32_0 : i32, i32, i32
  }
  func.func @transform_3(%arg0: i32) -> (i32, i32, i32) {
    %c0_i32 = arith.constant 0 : i32
    %c0_i32_0 = arith.constant 0 : i32
    %c0_i32_1 = arith.constant 0 : i32
    return %arg0, %c0_i32, %c0_i32_0 : i32, i32, i32
  }
  func.func @transform_4(%arg0: i32) -> (i32, i32) {
    %c0_i32 = arith.constant 0 : i32
    %c0_i32_0 = arith.constant 0 : i32
    %c0_i32_1 = arith.constant 0 : i32
    return %c0_i32, %c0_i32_0 : i32, i32
  }
  func.func @transform_5(%arg0: i32) -> (i32, i32) {
    %c0_i32 = arith.constant 0 : i32
    %c0_i32_0 = arith.constant 0 : i32
    %c0_i32_1 = arith.constant 0 : i32
    return %c0_i32, %c0_i32_0 : i32, i32
  }
  func.func @transform_6(%arg0: i32) -> (i32, i32) {
    %c0_i32 = arith.constant 0 : i32
    %c0_i32_0 = arith.constant 0 : i32
    %c0_i32_1 = arith.constant 0 : i32
    return %c0_i32, %c0_i32_0 : i32, i32
  }
  func.func @transform_7(%arg0: i32) -> (i32, i32) {
    %c0_i32 = arith.constant 0 : i32
    %c0_i32_0 = arith.constant 0 : i32
    %c0_i32_1 = arith.constant 0 : i32
    return %c0_i32, %c0_i32_0 : i32, i32
  }
  func.func @transform_8(%arg0: i32) -> (i32, i32) {
    %c0_i32 = arith.constant 0 : i32
    %c0_i32_0 = arith.constant 0 : i32
    %c0_i32_1 = arith.constant 0 : i32
    return %c0_i32, %c0_i32_0 : i32, i32
  }
  func.func @transform_9(%arg0: i32) -> (i32, i32) {
    %c0_i32 = arith.constant 0 : i32
    %c0_i32_0 = arith.constant 0 : i32
    %c0_i32_1 = arith.constant 0 : i32
    return %c0_i32, %c0_i32_0 : i32, i32
  }
  func.func @transform_10(%arg0: i32) -> (i32, i32) {
    %c0_i32 = arith.constant 0 : i32
    %c0_i32_0 = arith.constant 0 : i32
    %c0_i32_1 = arith.constant 0 : i32
    return %c0_i32, %c0_i32_0 : i32, i32
  }
  func.func @transform_11(%arg0: i32) -> (i32, i32, i32) {
    %c0_i32 = arith.constant 0 : i32
    %c0_i32_0 = arith.constant 0 : i32
    %c0_i32_1 = arith.constant 0 : i32
    return %arg0, %c0_i32, %c0_i32_0 : i32, i32, i32
  }
}

</mosaic_0001>

<llo_original>
// kernel: tpu_custom_call.1
$region0: #{tpu_custom_call.1}
  #allocation0 [shape = 'u32[]', space=smem, size = 0x4, offset = 0x4, fixed_abs, tag = 'smem constant byte address 0x4 - core index']
  #allocation1 [shape = 'u32[144,128]{1,0:T(1,128)}', space=vmem, size = 0x12000, scoped, tag = 'internal scratch']
  %s0 = inlined_call_operand.hbm [shape: f32[8,128], index: 0, kind: input, shape index: {}]
  %s1 = inlined_call_operand.hbm [shape: f32[8,128], index: 1, kind: output, shape index: {}]
  %s2 = sld [smem:[#allocation0]]
  $region18: #{tpu_custom_call.1} parent=0
    _
  %s4 = ssub.s32 1, %s2
  %s5 = scalar_select 0, %s4, %s2
  $region1: #{tpu_custom_call.1} parent=0
    #allocation2 [shape = 'u8[4096]{0}', space=vmem, size = 0x1000, scoped, tag = 'input window, operand 0, single buffered']
    #allocation3 [shape = 's32[1]{0}', space=sflag, size = 0x4, scoped, tag = 'scoped memory for tpu_custom_call.1']
    #allocation4 [shape = 's32[1]{0}', space=sflag, size = 0x4, scoped, tag = 'scoped memory for tpu_custom_call.1']
    #allocation5 [shape = 'u8[4096]{0}', space=vmem, size = 0x1000, scoped, tag = 'output window, operand 0, single buffered']
    %6 = vsyncpa [#allocation3], 0
    %7 = vsyncpa [#allocation4], 0
    // Predicated region
    $region2: #{tpu_custom_call.1} parent=1 // pred_check
      _
    $region3: #{tpu_custom_call.1} parent=1 // pred_check_branch
      %9 = sbr.rel (0) target = $region5
    $region4: #{tpu_custom_call.1} parent=1 // pred_region
      %s11 = ssub.s32 128, 128
      %12 = vsyncadd [#allocation3], %s11
      %s14 = sshll.u32 [#allocation2], 4
      %s15 = int_to_ptr.vmem [resolvable:$true] %s14
      %17 = dma.hbm_to_vmem [thread:$0]  %s0, 128, %s15, [#allocation3]
    $region5: #{tpu_custom_call.1} parent=1 // pred_fallthru
      _
    // Predicated region
    $region6: #{tpu_custom_call.1} parent=1 // pred_check
      _
    $region7: #{tpu_custom_call.1} parent=1 // pred_check_branch
      %19 = sbr.rel (0) target = $region9
    $region8: #{tpu_custom_call.1} parent=1 // pred_region
      %20 = dma.done [#allocation3], 128
    $region9: #{tpu_custom_call.1} parent=1 // pred_fallthru
      _
    %v21 = vld [vmem:[#allocation2] sm:$0xff]
    %v22 = vadd.f32 %v21, 1.0
    %23 = vst [vmem:[#allocation5] sm:$0xff] %v22
    // Predicated region
    $region10: #{tpu_custom_call.1} parent=1 // pred_check
      _
    $region11: #{tpu_custom_call.1} parent=1 // pred_check_branch
      %25 = sbr.rel (0) target = $region13
    $region12: #{tpu_custom_call.1} parent=1 // pred_region
      %s27 = ssub.s32 128, 128
      %28 = vsyncadd [#allocation4], %s27
      %s30 = sshll.u32 [#allocation5], 4
      %s31 = int_to_ptr.vmem [resolvable:$true] %s30
      %33 = dma.vmem_to_hbm [thread:$0]  %s31, 128, %s1, [#allocation4]
    $region13: #{tpu_custom_call.1} parent=1 // pred_fallthru
      _
    // Predicated region
    $region14: #{tpu_custom_call.1} parent=1 // pred_check
      _
    $region15: #{tpu_custom_call.1} parent=1 // pred_check_branch
      %35 = sbr.rel (0) target = $region17
    $region16: #{tpu_custom_call.1} parent=1 // pred_region
      %36 = dma.done [#allocation4], 128
    $region17: #{tpu_custom_call.1} parent=1 // pred_fallthru
      _
    %37 = vsyncpa [#allocation3], 1
    %38 = vsyncpa [#allocation4], 1

// kernel: tpu_custom_call.1
$region0: #{tpu_custom_call.1}
  #allocation0 [shape = 'u32[]', space=smem, size = 0x4, offset = 0x4, fixed_abs, tag = 'smem constant byte address 0x4 - core index']
  #allocation1 [shape = 'u32[144,128]{1,0:T(1,128)}', space=vmem, size = 0x12000, scoped, tag = 'internal scratch']
  #allocation2 [shape = 'f32[8,64]{1,0:T(8,128)}', space=vmem, size = 0x1000, scoped, tag = 'scratch operand']
  %s0 = inlined_call_operand.hbm [shape: f32[2,8,64], index: 0, kind: input, shape index: {}]
  %s1 = inlined_call_operand.hbm [shape: f32[2,8,64], index: 1, kind: input, shape index: {}]
  %s2 = inlined_call_operand.hbm [shape: f32[2,8,64], index: 2, kind: input, shape index: {}]
  %s3 = inlined_call_operand.hbm [shape: f32[2,8,64], index: 3, kind: input, shape index: {}]
  %s4 = inlined_call_operand.hbm [shape: bf16[64,128], index: 4, kind: input, shape index: {}]
  %s5 = inlined_call_operand.vmem [shape: f32[1,128], index: 5, kind: input, shape index: {}]
  %s6 = inlined_call_operand.hbm [shape: bf16[64,64], index: 6, kind: input, shape index: {}]
  %s7 = inlined_call_operand.vmem [shape: f32[1,64], index: 7, kind: input, shape index: {}]
  %s8 = inlined_call_operand.hbm [shape: bf16[64,64], index: 8, kind: input, shape index: {}]
  %s9 = inlined_call_operand.vmem [shape: f32[1,64], index: 9, kind: input, shape index: {}]
  %s10 = inlined_call_operand.vmem [shape: f32[2,64], index: 10, kind: input, shape index: {}]
  %s11 = inlined_call_operand.hbm [shape: f32[2,8,64], index: 11, kind: output, shape index: {}]
  %s12 = sld [smem:[#allocation0]]
  $region105: #{tpu_custom_call.1} parent=0
    _
  %s14 = ssub.s32 1, %s12
  %s15 = scalar_select 0, %s14, %s12
  $region1: #{tpu_custom_call.1} parent=0
    #allocation3 [shape = 'u8[8192]{0}', space=vmem, size = 0x2000, scoped, tag = 'input window, operand 0']
    #allocation4 [shape = 's32[2]{0}', space=sflag, size = 0x8, scoped, tag = 'scoped memory for tpu_custom_call.1']
    #allocation5 [shape = 's32[2]{0}', space=sflag, size = 0x8, scoped, tag = 'scoped memory for tpu_custom_call.1']
    #allocation6 [shape = 'u8[8192]{0}', space=vmem, size = 0x2000, scoped, tag = 'input window, operand 1']
    #allocation7 [shape = 's32[2]{0}', space=sflag, size = 0x8, scoped, tag = 'scoped memory for tpu_custom_call.1']
    #allocation8 [shape = 'u8[8192]{0}', space=vmem, size = 0x2000, scoped, tag = 'input window, operand 2']
    #allocation9 [shape = 'u8[8192]{0}', space=vmem, size = 0x2000, scoped, tag = 'input window, operand 3']
    #allocation10 [shape = 's32[2]{0}', space=sflag, size = 0x8, scoped, tag = 'scoped memory for tpu_custom_call.1']
    #allocation11 [shape = 'u8[16384]{0}', space=vmem, size = 0x4000, scoped, tag = 'input window, operand 4, single buffered']
    #allocation12 [shape = 'u8[16384]{0}', space=vmem, size = 0x4000, scoped, tag = 'input window, operand 6, single buffered']
    #allocation13 [shape = 's32[1]{0}', space=sflag, size = 0x4, scoped, tag = 'scoped memory for tpu_custom_call.1']
    #allocation14 [shape = 'u8[16384]{0}', space=vmem, size = 0x4000, scoped, tag = 'input window, operand 8, single buffered']
    #allocation15 [shape = 'u8[8192]{0}', space=vmem, size = 0x2000, scoped, tag = 'output window, operand 0']
    %16 = vsyncpa [#allocation4], 0
    %s17 = scalar_lea.sflag [#allocation4], 1
    %18 = vsyncpa %s17, 0
    %19 = vsyncpa [#allocation7], 0
    %s20 = scalar_lea.sflag [#allocation7], 1
    %21 = vsyncpa %s20, 0
    %22 = vsyncpa [#allocation10], 0
    %s23 = scalar_lea.sflag [#allocation10], 1
    %24 = vsyncpa %s23, 0
    %25 = vsyncpa [#allocation13], 0
    %26 = vsyncpa [#allocation5], 0
    %s27 = scalar_lea.sflag [#allocation5], 1
    %28 = vsyncpa %s27, 0
    loop: start=0, step=1, limit=4
    $region2: #{tpu_custom_call.1} parent=1 // loop_pre_header
      _
    $region3: #{tpu_custom_call.1} parent=1 // loop_header
      %s30 = sphi 0, %s34
      %p31 = scmp.ge.s32.totalorder %s30, 4
      %s40 = sphi 0, %s42
      %s43 = sphi 0, %s40
      %s44 = sphi 0, %s43
      %s60 = sphi 0, %s44
      %s66 = sphi 0, %s68
      %s69 = sphi 0, %s66
      %s70 = sphi 0, %s69
      %s86 = sphi 0, %s70
      %s92 = sphi 0, %s94
      %s95 = sphi 0, %s92
      %s96 = sphi 0, %s95
      %s112 = sphi 0, %s96
      %s118 = sphi 0, %s120
      %s121 = sphi 0, %s118
      %s122 = sphi 0, %s121
      %s138 = sphi 0, %s122
      %s142 = sphi 0, %s142
      %s144 = sphi 0, %s142
      %s145 = sphi 0, %s144
      %s159 = sphi 0, %s145
      %s163 = sphi 0, %s163
      %s165 = sphi 0, %s163
      %s166 = sphi 0, %s165
      %s180 = sphi 0, %s166
      %s184 = sphi 0, %s184
      %s186 = sphi 0, %s184
      %s187 = sphi 0, %s186
      %s201 = sphi 0, %s187
      %s205 = sphi 0, %s205
      %s207 = sphi 0, %s205
      %s208 = sphi 0, %s207
      %s222 = sphi 0, %s208
      %s226 = sphi 0, %s226
      %s228 = sphi 0, %s226
      %s229 = sphi 0, %s228
      %s243 = sphi 0, %s229
      %s247 = sphi 0, %s247
      %s249 = sphi 0, %s247
      %s250 = sphi 0, %s249
      %s264 = sphi 0, %s250
      %s268 = sphi 0, %s268
      %s270 = sphi 0, %s268
      %s271 = sphi 0, %s270
      %s285 = sphi 0, %s271
      %s291 = sphi 0, %s293
      %s294 = sphi 0, %s291
      %s295 = sphi 0, %s294
      %s311 = sphi 0, %s295
    $region4: #{tpu_custom_call.1} parent=1 // loop_header_branch
      %33 = sbr.rel (%p31) target = $region8
    $region5: #{tpu_custom_call.1} parent=1 // loop_body
      %s35 = ssub.s32 %s30, 1
      %s36 = ssub.s32 %s30, 2
      %s37 = sadd.s32 %s30, 1
      %s38 = ssub.s32 %s30, %s37
      %p39 = scmp.eq.s32.totalorder %s38, 0
      %s41 = sadd.s32 %s40, 1
      %s42 = scalar_select %p39, %s40, %s41
      %p45 = pneg %p39
      %p46 = scmp.eq.s32.totalorder %s30, 1
      %p47 = por %p45, %p46
      %p48 = scmp.ne.s32.totalorder %s40, %s43
      %p49 = scmp.eq.s32.totalorder %s30, 0
      %p50 = por %p48, %p49
      %p51 = scmp.ne.s32.totalorder %s40, %s43
      %p52 = scmp.eq.s32.totalorder %s35, 1
      %p53 = por %p51, %p52
      %p54 = scmp.ne.s32.totalorder %s43, %s44
      %p55 = scmp.eq.s32.totalorder %s35, 0
      %p56 = por %p54, %p55
      %p57 = scmp.ne.s32.totalorder %s43, %s44
      %p58 = scmp.eq.s32.totalorder %s36, 1
      %p59 = por %p57, %p58
      %p61 = scmp.ne.s32.totalorder %s44, %s60
      %p62 = scmp.eq.s32.totalorder %s36, 0
      %p63 = por %p61, %p62
      %s64 = ssub.s32 %s30, %s37
      %p65 = scmp.eq.s32.totalorder %s64, 0
      %s67 = sadd.s32 %s66, 1
      %s68 = scalar_select %p65, %s66, %s67
      %p71 = pneg %p65
      %p72 = scmp.eq.s32.totalorder %s30, 1
      %p73 = por %p71, %p72
      %p74 = scmp.ne.s32.totalorder %s66, %s69
      %p75 = scmp.eq.s32.totalorder %s30, 0
      %p76 = por %p74, %p75
      %p77 = scmp.ne.s32.totalorder %s66, %s69
      %p78 = scmp.eq.s32.totalorder %s35, 1
      %p79 = por %p77, %p78
      %p80 = scmp.ne.s32.totalorder %s69, %s70
      %p81 = scmp.eq.s32.totalorder %s35, 0
      %p82 = por %p80, %p81
      %p83 = scmp.ne.s32.totalorder %s69, %s70
      %p84 = scmp.eq.s32.totalorder %s36, 1
      %p85 = por %p83, %p84
      %p87 = scmp.ne.s32.totalorder %s70, %s86
      %p88 = scmp.eq.s32.totalorder %s36, 0
      %p89 = por %p87, %p88
      %s90 = ssub.s32 %s30, %s37
      %p91 = scmp.eq.s32.totalorder %s90, 0
      %s93 = sadd.s32 %s92, 1
      %s94 = scalar_select %p91, %s92, %s93
      %p97 = pneg %p91
      %p98 = scmp.eq.s32.totalorder %s30, 1
      %p99 = por %p97, %p98
      %p100 = scmp.ne.s32.totalorder %s92, %s95
      %p101 = scmp.eq.s32.totalorder %s30, 0
      %p102 = por %p100, %p101
      %p103 = scmp.ne.s32.totalorder %s92, %s95
      %p104 = scmp.eq.s32.totalorder %s35, 1
      %p105 = por %p103, %p104
      %p106 = scmp.ne.s32.totalorder %s95, %s96
      %p107 = scmp.eq.s32.totalorder %s35, 0
      %p108 = por %p106, %p107
      %p109 = scmp.ne.s32.totalorder %s95, %s96
      %p110 = scmp.eq.s32.totalorder %s36, 1
      %p111 = por %p109, %p110
      %p113 = scmp.ne.s32.totalorder %s96, %s112
      %p114 = scmp.eq.s32.totalorder %s36, 0
      %p115 = por %p113, %p114
      %s116 = ssub.s32 %s30, %s37
      %p117 = scmp.eq.s32.totalorder %s116, 0
      %s119 = sadd.s32 %s118, 1
      %s120 = scalar_select %p117, %s118, %s119
      %p123 = pneg %p117
      %p124 = scmp.eq.s32.totalorder %s30, 1
      %p125 = por %p123, %p124
      %p126 = scmp.ne.s32.totalorder %s118, %s121
      %p127 = scmp.eq.s32.totalorder %s30, 0
      %p128 = por %p126, %p127
      %p129 = scmp.ne.s32.totalorder %s118, %s121
      %p130 = scmp.eq.s32.totalorder %s35, 1
      %p131 = por %p129, %p130
      %p132 = scmp.ne.s32.totalorder %s121, %s122
      %p133 = scmp.eq.s32.totalorder %s35, 0
      %p134 = por %p132, %p133
      %p135 = scmp.ne.s32.totalorder %s121, %s122
      %p136 = scmp.eq.s32.totalorder %s36, 1
      %p137 = por %p135, %p136
      %p139 = scmp.ne.s32.totalorder %s122, %s138
      %p140 = scmp.eq.s32.totalorder %s36, 0
      %p141 = por %p139, %p140
      %s143 = sadd.s32 %s142, 1
      %p146 = scmp.eq.s32.totalorder %s30, 1
      %p147 = scmp.ne.s32.totalorder %s142, %s144
      %p148 = scmp.eq.s32.totalorder %s30, 0
      %p149 = por %p147, %p148
      %p150 = scmp.ne.s32.totalorder %s142, %s144
      %p151 = scmp.eq.s32.totalorder %s35, 1
      %p152 = por %p150, %p151
      %p153 = scmp.ne.s32.totalorder %s144, %s145
      %p154 = scmp.eq.s32.totalorder %s35, 0
      %p155 = por %p153, %p154
      %p156 = scmp.ne.s32.totalorder %s144, %s145
      %p157 = scmp.eq.s32.totalorder %s36, 1
      %p158 = por %p156, %p157
      %p160 = scmp.ne.s32.totalorder %s145, %s159
      %p161 = scmp.eq.s32.totalorder %s36, 0
      %p162 = por %p160, %p161
      %s164 = sadd.s32 %s163, 1
      %p167 = scmp.eq.s32.totalorder %s30, 1
      %p168 = scmp.ne.s32.totalorder %s163, %s165
      %p169 = scmp.eq.s32.totalorder %s30, 0
      %p170 = por %p168, %p169
      %p171 = scmp.ne.s32.totalorder %s163, %s165
      %p172 = scmp.eq.s32.totalorder %s35, 1
      %p173 = por %p171, %p172
      %p174 = scmp.ne.s32.totalorder %s165, %s166
      %p175 = scmp.eq.s32.totalorder %s35, 0
      %p176 = por %p174, %p175
      %p177 = scmp.ne.s32.totalorder %s165, %s166
      %p178 = scmp.eq.s32.totalorder %s36, 1
      %p179 = por %p177, %p178
      %p181 = scmp.ne.s32.totalorder %s166, %s180
      %p182 = scmp.eq.s32.totalorder %s36, 0
      %p183 = por %p181, %p182
      %s185 = sadd.s32 %s184, 1
      %p188 = scmp.eq.s32.totalorder %s30, 1
      %p189 = scmp.ne.s32.totalorder %s184, %s186
      %p190 = scmp.eq.s32.totalorder %s30, 0
      %p191 = por %p189, %p190
      %p192 = scmp.ne.s32.totalorder %s184, %s186
      %p193 = scmp.eq.s32.totalorder %s35, 1
      %p194 = por %p192, %p193
      %p195 = scmp.ne.s32.totalorder %s186, %s187
      %p196 = scmp.eq.s32.totalorder %s35, 0
      %p197 = por %p195, %p196
      %p198 = scmp.ne.s32.totalorder %s186, %s187
      %p199 = scmp.eq.s32.totalorder %s36, 1
      %p200 = por %p198, %p199
      %p202 = scmp.ne.s32.totalorder %s187, %s201
      %p203 = scmp.eq.s32.totalorder %s36, 0
      %p204 = por %p202, %p203
      %s206 = sadd.s32 %s205, 1
      %p209 = scmp.eq.s32.totalorder %s30, 1
      %p210 = scmp.ne.s32.totalorder %s205, %s207
      %p211 = scmp.eq.s32.totalorder %s30, 0
      %p212 = por %p210, %p211
      %p213 = scmp.ne.s32.totalorder %s205, %s207
      %p214 = scmp.eq.s32.totalorder %s35, 1
      %p215 = por %p213, %p214
      %p216 = scmp.ne.s32.totalorder %s207, %s208
      %p217 = scmp.eq.s32.totalorder %s35, 0
      %p218 = por %p216, %p217
      %p219 = scmp.ne.s32.totalorder %s207, %s208
      %p220 = scmp.eq.s32.totalorder %s36, 1
      %p221 = por %p219, %p220
      %p223 = scmp.ne.s32.totalorder %s208, %s222
      %p224 = scmp.eq.s32.totalorder %s36, 0
      %p225 = por %p223, %p224
      %s227 = sadd.s32 %s226, 1
      %p230 = scmp.eq.s32.totalorder %s30, 1
      %p231 = scmp.ne.s32.totalorder %s226, %s228
      %p232 = scmp.eq.s32.totalorder %s30, 0
      %p233 = por %p231, %p232
      %p234 = scmp.ne.s32.totalorder %s226, %s228
      %p235 = scmp.eq.s32.totalorder %s35, 1
      %p236 = por %p234, %p235
      %p237 = scmp.ne.s32.totalorder %s228, %s229
      %p238 = scmp.eq.s32.totalorder %s35, 0
      %p239 = por %p237, %p238
      %p240 = scmp.ne.s32.totalorder %s228, %s229
      %p241 = scmp.eq.s32.totalorder %s36, 1
      %p242 = por %p240, %p241
      %p244 = scmp.ne.s32.totalorder %s229, %s243
      %p245 = scmp.eq.s32.totalorder %s36, 0
      %p246 = por %p244, %p245
      %s248 = sadd.s32 %s247, 1
      %p251 = scmp.eq.s32.totalorder %s30, 1
      %p252 = scmp.ne.s32.totalorder %s247, %s249
      %p253 = scmp.eq.s32.totalorder %s30, 0
      %p254 = por %p252, %p253
      %p255 = scmp.ne.s32.totalorder %s247, %s249
      %p256 = scmp.eq.s32.totalorder %s35, 1
      %p257 = por %p255, %p256
      %p258 = scmp.ne.s32.totalorder %s249, %s250
      %p259 = scmp.eq.s32.totalorder %s35, 0
      %p260 = por %p258, %p259
      %p261 = scmp.ne.s32.totalorder %s249, %s250
      %p262 = scmp.eq.s32.totalorder %s36, 1
      %p263 = por %p261, %p262
      %p265 = scmp.ne.s32.totalorder %s250, %s264
      %p266 = scmp.eq.s32.totalorder %s36, 0
      %p267 = por %p265, %p266
      %s269 = sadd.s32 %s268, 1
      %p272 = scmp.eq.s32.totalorder %s30, 1
      %p273 = scmp.ne.s32.totalorder %s268, %s270
      %p274 = scmp.eq.s32.totalorder %s30, 0
      %p275 = por %p273, %p274
      %p276 = scmp.ne.s32.totalorder %s268, %s270
      %p277 = scmp.eq.s32.totalorder %s35, 1
      %p278 = por %p276, %p277
      %p279 = scmp.ne.s32.totalorder %s270, %s271
      %p280 = scmp.eq.s32.totalorder %s35, 0
      %p281 = por %p279, %p280
      %p282 = scmp.ne.s32.totalorder %s270, %s271
      %p283 = scmp.eq.s32.totalorder %s36, 1
      %p284 = por %p282, %p283
      %p286 = scmp.ne.s32.totalorder %s271, %s285
      %p287 = scmp.eq.s32.totalorder %s36, 0
      %p288 = por %p286, %p287
      %s289 = ssub.s32 %s30, %s37
      %p290 = scmp.eq.s32.totalorder %s289, 0
      %s292 = sadd.s32 %s291, 1
      %s293 = scalar_select %p290, %s291, %s292
      %p296 = pneg %p290
      %p297 = scmp.eq.s32.totalorder %s30, 1
      %p298 = por %p296, %p297
      %p299 = scmp.ne.s32.totalorder %s291, %s294
      %p300 = scmp.eq.s32.totalorder %s30, 0
      %p301 = por %p299, %p300
      %p302 = scmp.ne.s32.totalorder %s291, %s294
      %p303 = scmp.eq.s32.totalorder %s35, 1
      %p304 = por %p302, %p303
      %p305 = scmp.ne.s32.totalorder %s294, %s295
      %p306 = scmp.eq.s32.totalorder %s35, 0
      %p307 = por %p305, %p306
      %p308 = scmp.ne.s32.totalorder %s294, %s295
      %p309 = scmp.eq.s32.totalorder %s36, 1
      %p310 = por %p308, %p309
      %p312 = scmp.ne.s32.totalorder %s295, %s311
      %p313 = scmp.eq.s32.totalorder %s36, 0
      %p314 = por %p312, %p313
      %p315 = scmp.le.s32.totalorder 1, %s30
      %p316 = scmp.lt.s32.totalorder %s30, 3
      %p317 = pnand %p315, %p316
      %p318 = pneg %p317
      // Predicated region
      $region9: #{tpu_custom_call.1} parent=5 // pred_check
        _
      $region10: #{tpu_custom_call.1} parent=5 // pred_check_branch
        %320 = sbr.rel (%p317) target = $region12
      $region11: #{tpu_custom_call.1} parent=5 // pred_region
        %s321 = ssub.s32 %s30, 1
        // Predicated region
        $region13: #{tpu_custom_call.1} parent=11 // pred_check
          %p322 = pneg %p155
        $region14: #{tpu_custom_call.1} parent=11 // pred_check_branch
          %324 = sbr.rel (%p322) target = $region16
        $region15: #{tpu_custom_call.1} parent=11 // pred_region
          %s326 = ssub.s32 512, 512
          %327 = vsyncadd [#allocation10], %s326
          %s328 = sshll.u32 [#allocation11], 4
          %s329 = int_to_ptr.vmem [resolvable:$true] %s328
          %334 = dma.hbm_to_vmem [thread:$0]  %s4, 512, %s329, [#allocation10], 64, 64, 4
        $region16: #{tpu_custom_call.1} parent=11 // pred_fallthru
          _
        // Predicated region
        $region17: #{tpu_custom_call.1} parent=11 // pred_check
          %p335 = pneg %p176
        $region18: #{tpu_custom_call.1} parent=11 // pred_check_branch
          %337 = sbr.rel (%p335) target = $region20
        $region19: #{tpu_custom_call.1} parent=11 // pred_region
          _
        $region20: #{tpu_custom_call.1} parent=11 // pred_fallthru
          _
        // Predicated region
        $region21: #{tpu_custom_call.1} parent=11 // pred_check
          %p338 = pneg %p197
        $region22: #{tpu_custom_call.1} parent=11 // pred_check_branch
          %340 = sbr.rel (%p338) target = $region24
        $region23: #{tpu_custom_call.1} parent=11 // pred_region
          %s342 = ssub.s32 512, 512
          %343 = vsyncadd [#allocation13], %s342
          %s344 = sshll.u32 [#allocation12], 4
          %s345 = int_to_ptr.vmem [resolvable:$true] %s344
          %350 = dma.hbm_to_vmem [thread:$0]  %s6, 512, %s345, [#allocation13], 64, 64, 4
        $region24: #{tpu_custom_call.1} parent=11 // pred_fallthru
          _
        // Predicated region
        $region25: #{tpu_custom_call.1} parent=11 // pred_check
          %p351 = pneg %p218
        $region26: #{tpu_custom_call.1} parent=11 // pred_check_branch
          %353 = sbr.rel (%p351) target = $region28
        $region27: #{tpu_custom_call.1} parent=11 // pred_region
          _
        $region28: #{tpu_custom_call.1} parent=11 // pred_fallthru
          _
        // Predicated region
        $region29: #{tpu_custom_call.1} parent=11 // pred_check
          %p354 = pneg %p239
        $region30: #{tpu_custom_call.1} parent=11 // pred_check_branch
          %356 = sbr.rel (%p354) target = $region32
        $region31: #{tpu_custom_call.1} parent=11 // pred_region
          %s358 = ssub.s32 512, 512
          %359 = vsyncadd [#allocation13], %s358
          %s360 = sshll.u32 [#allocation14], 4
          %s361 = int_to_ptr.vmem [resolvable:$true] %s360
          %366 = dma.hbm_to_vmem [thread:$0]  %s8, 512, %s361, [#allocation13], 64, 64, 4
        $region32: #{tpu_custom_call.1} parent=11 // pred_fallthru
          _
        // Predicated region
        $region33: #{tpu_custom_call.1} parent=11 // pred_check
          %p367 = pneg %p260
        $region34: #{tpu_custom_call.1} parent=11 // pred_check_branch
          %369 = sbr.rel (%p367) target = $region36
        $region35: #{tpu_custom_call.1} parent=11 // pred_region
          _
        $region36: #{tpu_custom_call.1} parent=11 // pred_fallthru
          _
        // Predicated region
        $region37: #{tpu_custom_call.1} parent=11 // pred_check
          %p370 = pneg %p281
        $region38: #{tpu_custom_call.1} parent=11 // pred_check_branch
          %372 = sbr.rel (%p370) target = $region40
        $region39: #{tpu_custom_call.1} parent=11 // pred_region
          _
        $region40: #{tpu_custom_call.1} parent=11 // pred_fallthru
          _
      $region12: #{tpu_custom_call.1} parent=5 // pred_fallthru
        _
      %p373 = scmp.lt.s32.totalorder %s30, 2
      // Predicated region
      $region41: #{tpu_custom_call.1} parent=5 // pred_check
        %p374 = pneg %p373
      $region42: #{tpu_custom_call.1} parent=5 // pred_check_branch
        %376 = sbr.rel (%p374) target = $region44
      $region43: #{tpu_custom_call.1} parent=5 // pred_region
        // Predicated region
        $region45: #{tpu_custom_call.1} parent=43 // pred_check
          %p377 = pneg %p50
        $region46: #{tpu_custom_call.1} parent=43 // pred_check_branch
          %379 = sbr.rel (%p377) target = $region48
        $region47: #{tpu_custom_call.1} parent=43 // pred_region
          %s380 = sand.u32 %s40, 1
          %s381 = scalar_lea.sflag [#allocation4], %s380
          %s382 = sand.u32 %s40, 1
          %s383 = smul.addr %s382, 8
          %s384 = scalar_lea.vmem [#allocation3], %s383
          %s386 = ssub.s32 128, 128
          %387 = vsyncadd %s381, %s386
          %s388 = smul.addr %s30, 128
          %s389 = scalar_lea.hbm %s0, %s388
          %s391 = sshll.u32 %s384, 4
          %s392 = int_to_ptr.vmem [resolvable:$true] %s391
          %394 = dma.hbm_to_vmem [thread:$0]  %s389, 128, %s392, %s381
        $region48: #{tpu_custom_call.1} parent=43 // pred_fallthru
          _
        // Predicated region
        $region49: #{tpu_custom_call.1} parent=43 // pred_check
          %p395 = pneg %p76
        $region50: #{tpu_custom_call.1} parent=43 // pred_check_branch
          %397 = sbr.rel (%p395) target = $region52
        $region51: #{tpu_custom_call.1} parent=43 // pred_region
          %s398 = sand.u32 %s30, 1
          %s399 = scalar_lea.sflag [#allocation7], %s398
          %s400 = sand.u32 %s66, 1
          %s401 = smul.addr %s400, 8
          %s402 = scalar_lea.vmem [#allocation6], %s401
          %s404 = ssub.s32 128, 128
          %405 = vsyncadd %s399, %s404
          %s406 = smul.addr %s30, 128
          %s407 = scalar_lea.hbm %s1, %s406
          %s409 = sshll.u32 %s402, 4
          %s410 = int_to_ptr.vmem [resolvable:$true] %s409
          %412 = dma.hbm_to_vmem [thread:$0]  %s407, 128, %s410, %s399
        $region52: #{tpu_custom_call.1} parent=43 // pred_fallthru
          _
        // Predicated region
        $region53: #{tpu_custom_call.1} parent=43 // pred_check
          %p413 = pneg %p102
        $region54: #{tpu_custom_call.1} parent=43 // pred_check_branch
          %415 = sbr.rel (%p413) target = $region56
        $region55: #{tpu_custom_call.1} parent=43 // pred_region
          %s416 = sand.u32 %s30, 1
          %s417 = scalar_lea.sflag [#allocation7], %s416
          %s418 = sand.u32 %s92, 1
          %s419 = smul.addr %s418, 8
          %s420 = scalar_lea.vmem [#allocation8], %s419
          %s422 = ssub.s32 128, 128
          %423 = vsyncadd %s417, %s422
          %s424 = smul.addr %s30, 128
          %s425 = scalar_lea.hbm %s2, %s424
          %s427 = sshll.u32 %s420, 4
          %s428 = int_to_ptr.vmem [resolvable:$true] %s427
          %430 = dma.hbm_to_vmem [thread:$0]  %s425, 128, %s428, %s417
        $region56: #{tpu_custom_call.1} parent=43 // pred_fallthru
          _
        // Predicated region
        $region57: #{tpu_custom_call.1} parent=43 // pred_check
          %p431 = pneg %p128
        $region58: #{tpu_custom_call.1} parent=43 // pred_check_branch
          %433 = sbr.rel (%p431) target = $region60
        $region59: #{tpu_custom_call.1} parent=43 // pred_region
          %s434 = sand.u32 %s30, 1
          %s435 = scalar_lea.sflag [#allocation10], %s434
          %s436 = sand.u32 %s118, 1
          %s437 = smul.addr %s436, 8
          %s438 = scalar_lea.vmem [#allocation9], %s437
          %s440 = ssub.s32 128, 128
          %441 = vsyncadd %s435, %s440
          %s442 = smul.addr %s30, 128
          %s443 = scalar_lea.hbm %s3, %s442
          %s445 = sshll.u32 %s438, 4
          %s446 = int_to_ptr.vmem [resolvable:$true] %s445
          %448 = dma.hbm_to_vmem [thread:$0]  %s443, 128, %s446, %s435
        $region60: #{tpu_custom_call.1} parent=43 // pred_fallthru
          _
      $region44: #{tpu_custom_call.1} parent=5 // pred_fallthru
        _
      %p449 = scmp.le.s32.totalorder 1, %s30
      %p450 = scmp.lt.s32.totalorder %s30, 3
      %p451 = pnand %p449, %p450
      %p452 = pneg %p451
      // Predicated region
      $region61: #{tpu_custom_call.1} parent=5 // pred_check
        _
      $region62: #{tpu_custom_call.1} parent=5 // pred_check_branch
        %454 = sbr.rel (%p451) target = $region64
      $region63: #{tpu_custom_call.1} parent=5 // pred_region
        %s455 = ssub.s32 %s30, 1
        %s456 = sand.u32 %s43, 1
        %s457 = scalar_lea.sflag [#allocation4], %s456
        %s458 = sand.u32 %s43, 1
        %s459 = smul.addr %s458, 8
        %s460 = scalar_lea.vmem [#allocation3], %s459
        // Predicated region
        $region65: #{tpu_custom_call.1} parent=63 // pred_check
          %p461 = pneg %p56
        $region66: #{tpu_custom_call.1} parent=63 // pred_check_branch
          %463 = sbr.rel (%p461) target = $region68
        $region67: #{tpu_custom_call.1} parent=63 // pred_region
          %464 = dma.done %s457, 128
        $region68: #{tpu_custom_call.1} parent=63 // pred_fallthru
          _
        %s465 = sand.u32 %s35, 1
        %s466 = scalar_lea.sflag [#allocation7], %s465
        %s467 = sand.u32 %s69, 1
        %s468 = smul.addr %s467, 8
        %s469 = scalar_lea.vmem [#allocation6], %s468
        // Predicated region
        $region69: #{tpu_custom_call.1} parent=63 // pred_check
          %p470 = pneg %p82
        $region70: #{tpu_custom_call.1} parent=63 // pred_check_branch
          %472 = sbr.rel (%p470) target = $region72
        $region71: #{tpu_custom_call.1} parent=63 // pred_region
          %473 = dma.done %s466, 128
        $region72: #{tpu_custom_call.1} parent=63 // pred_fallthru
          _
        %s474 = sand.u32 %s35, 1
        %s475 = scalar_lea.sflag [#allocation7], %s474
        %s476 = sand.u32 %s95, 1
        %s477 = smul.addr %s476, 8
        %s478 = scalar_lea.vmem [#allocation8], %s477
        // Predicated region
        $region73: #{tpu_custom_call.1} parent=63 // pred_check
          %p479 = pneg %p108
        $region74: #{tpu_custom_call.1} parent=63 // pred_check_branch
          %481 = sbr.rel (%p479) target = $region76
        $region75: #{tpu_custom_call.1} parent=63 // pred_region
          %482 = dma.done %s475, 128
        $region76: #{tpu_custom_call.1} parent=63 // pred_fallthru
          _
        %s483 = sand.u32 %s35, 1
        %s484 = scalar_lea.sflag [#allocation10], %s483
        %s485 = sand.u32 %s121, 1
        %s486 = smul.addr %s485, 8
        %s487 = scalar_lea.vmem [#allocation9], %s486
        // Predicated region
        $region77: #{tpu_custom_call.1} parent=63 // pred_check
          %p488 = pneg %p134
        $region78: #{tpu_custom_call.1} parent=63 // pred_check_branch
          %490 = sbr.rel (%p488) target = $region80
        $region79: #{tpu_custom_call.1} parent=63 // pred_region
          %491 = dma.done %s484, 128
        $region80: #{tpu_custom_call.1} parent=63 // pred_fallthru
          _
        // Predicated region
        $region81: #{tpu_custom_call.1} parent=63 // pred_check
          %p492 = pneg %p155
        $region82: #{tpu_custom_call.1} parent=63 // pred_check_branch
          %494 = sbr.rel (%p492) target = $region84
        $region83: #{tpu_custom_call.1} parent=63 // pred_region
          %495 = dma.done [#allocation10], 512
        $region84: #{tpu_custom_call.1} parent=63 // pred_fallthru
          _
        // Predicated region
        $region85: #{tpu_custom_call.1} parent=63 // pred_check
          %p496 = pneg %p197
        $region86: #{tpu_custom_call.1} parent=63 // pred_check_branch
          %498 = sbr.rel (%p496) target = $region88
        $region87: #{tpu_custom_call.1} parent=63 // pred_region
          %499 = dma.done [#allocation13], 512
        $region88: #{tpu_custom_call.1} parent=63 // pred_fallthru
          _
        // Predicated region
        $region89: #{tpu_custom_call.1} parent=63 // pred_check
          %p500 = pneg %p239
        $region90: #{tpu_custom_call.1} parent=63 // pred_check_branch
          %502 = sbr.rel (%p500) target = $region92
        $region91: #{tpu_custom_call.1} parent=63 // pred_region
          %503 = dma.done [#allocation13], 512
        $region92: #{tpu_custom_call.1} parent=63 // pred_fallthru
          _
        %s504 = sand.u32 %s43, 1
        %s505 = scalar_lea.sflag [#allocation4], %s504
        %s506 = sand.u32 %s43, 1
        %s507 = smul.addr %s506, 8
        %s508 = scalar_lea.vmem [#allocation3], %s507
        %p509 = pneg %p56
        %p510 = pneg %p53
        %s511 = sand.u32 %s35, 1
        %s512 = scalar_lea.sflag [#allocation7], %s511
        %s513 = sand.u32 %s69, 1
        %s514 = smul.addr %s513, 8
        %s515 = scalar_lea.vmem [#allocation6], %s514
        %p516 = pneg %p82
        %p517 = pneg %p79
        %s518 = sand.u32 %s35, 1
        %s519 = scalar_lea.sflag [#allocation7], %s518
        %s520 = sand.u32 %s95, 1
        %s521 = smul.addr %s520, 8
        %s522 = scalar_lea.vmem [#allocation8], %s521
        %p523 = pneg %p108
        %p524 = pneg %p105
        %s525 = sand.u32 %s35, 1
        %s526 = scalar_lea.sflag [#allocation10], %s525
        %s527 = sand.u32 %s121, 1
        %s528 = smul.addr %s527, 8
        %s529 = scalar_lea.vmem [#allocation9], %s528
        %p530 = pneg %p134
        %p531 = pneg %p131
        %p532 = pneg %p155
        %p533 = pneg %p152
        %p534 = pneg %p176
        %p535 = pneg %p173
        %p536 = pneg %p197
        %p537 = pneg %p194
        %p538 = pneg %p218
        %p539 = pneg %p215
        %p540 = pneg %p239
        %p541 = pneg %p236
        %p542 = pneg %p260
        %p543 = pneg %p257
        %p544 = pneg %p281
        %p545 = pneg %p278
        %p546 = pneg %p307
        %p547 = pneg %p304
        %s548 = sand.u32 %s294, 1
        %s549 = scalar_lea.sflag [#allocation5], %s548
        %s550 = sand.u32 %s294, 1
        %s551 = smul.addr %s550, 8
        %s552 = scalar_lea.vmem [#allocation15], %s551
        %v554 = vld [vmem:[%s460] sm:$0xff]
        %v555 = vld [vmem:[%s469] sm:$0xff]
        %v556 = vld [vmem:[#allocation11] sm:$0xf]
        %v557 = vld [vmem:[#allocation11 + $0x4] sm:$0xf]
        %v558 = vld [vmem:[#allocation11 + $0x8] sm:$0xf]
        %v559 = vld [vmem:[#allocation11 + $0xc] sm:$0xf]
        %v560 = vld [vmem:[#allocation11 + $0x10] sm:$0xf]
        %v561 = vld [vmem:[#allocation11 + $0x14] sm:$0xf]
        %v562 = vld [vmem:[#allocation11 + $0x18] sm:$0xf]
        %v563 = vld [vmem:[#allocation11 + $0x1c] sm:$0xf]
        %v564 = vld [vmem:[%s5] sm:$0x1]
        %v565 = vadd.f32 %v554, %v555
        %v566 = vpack.c.bf16 %v565, %v565
        %v568 = vlaneseq
        %v569 = vshrl.u32 %v568, 7
        %v570 = vsub.s32 0, %v569
        %v571 = vrot.slane %v564, %v570
        %v581 = vunpack.c.l.b16 %v556
        %v582 = vunpack.c.l.b16 %v557
        %v583 = vunpack.c.l.b16 %v558
        %v584 = vunpack.c.l.b16 %v559
        %v585 = vunpack.c.l.b16 %v560
        %v586 = vunpack.c.l.b16 %v561
        %v587 = vunpack.c.l.b16 %v562
        %v588 = vunpack.c.l.b16 %v563
        %v589 = vpack.c.b16 %v582, %v581
        %v590 = vpack.c.b16 %v584, %v583
        %v591 = vpack.c.b16 %v586, %v585
        %v592 = vpack.c.b16 %v588, %v587
        %vm597 = vcmask 523264
        %v599 = vsel %vm597, %v566, 0
        %601 = vmatprep.subr.bf16.mxu0 0
        %602 = vmatpush1.bf16.msra.mxu0 %v589
        %603 = vmatprep.subr.bf16.mxu0 0
        %604 = vmatpush1.bf16.msra.mxu0 %v590
        %605 = vmatprep.subr.bf16.mxu0 0
        %606 = vmatpush1.bf16.msra.mxu0 %v591
        %607 = vmatprep.subr.bf16.mxu0 0
        %608 = vmatpush1.bf16.msra.mxu0 %v592
        %609 = vmatprep.subr.bf16.mxu0 0
        %610 = vmatpush1.bf16.msra.mxu0 0
        %611 = vmatprep.subr.bf16.mxu0 0
        %612 = vmatpush1.bf16.msra.mxu0 0
        %613 = vmatprep.subr.bf16.mxu0 0
        %614 = vmatpush1.bf16.msra.mxu0 0
        %615 = vmatprep.subr.bf16.mxu0 0
        %616 = vmatpush1.bf16.msra.mxu0 0
        %617 = vmatprep.subr.bf16.mxu0 0
        %618 = vmatpush1.bf16.msra.mxu0 0
        %619 = vmatprep.subr.bf16.mxu0 0
        %620 = vmatpush1.bf16.msra.mxu0 0
        %621 = vmatprep.subr.bf16.mxu0 0
        %622 = vmatpush1.bf16.msra.mxu0 0
        %623 = vmatprep.subr.bf16.mxu0 0
        %624 = vmatpush1.bf16.msra.mxu0 0
        %625 = vmatprep.subr.bf16.mxu0 0
        %626 = vmatpush1.bf16.msra.mxu0 0
        %627 = vmatprep.subr.bf16.mxu0 0
        %628 = vmatpush1.bf16.msra.mxu0 0
        %629 = vmatprep.subr.bf16.mxu0 0
        %630 = vmatpush1.bf16.msra.mxu0 0
        %631 = vmatprep.subr.bf16.mxu0 0
        %632 = vmatpush1.bf16.msra.mxu0 0
        %633 = vmatprep.mubr.bf16.mxu0 0
        %634 = vmatmul.mubr.bf16.gmra.mrb[0].mxu0 %v599
        %v635 = vpop.f32.mrb[0].mxu0
        %v636 = vadd.f32 %v571, %v635
        %v637 = vpop.f32.mrb[0].mxu0
        %v638 = vpop.f32.mrb[0].mxu0
        %v639 = vpop.f32.mrb[0].mxu0
        %640 = vdwg.mxu0
        %v641 = vmul.f32 %v636, 0.25
        %v642 = vpack.c.bf16 %v641, %v641
        %v643 = vpack.c.bf16 %v636, %v636
        %v644 = vpack.c.bf16 %v554, %v554
        %v645 = vld [vmem:[#allocation12] sm:$0xf]
        %v646 = vld [vmem:[#allocation12 + $0x4] sm:$0xf]
        %v647 = vld [vmem:[#allocation12 + $0x8] sm:$0xf]
        %v648 = vld [vmem:[#allocation12 + $0xc] sm:$0xf]
        %v649 = vld [vmem:[#allocation12 + $0x10] sm:$0xf]
        %v650 = vld [vmem:[#allocation12 + $0x14] sm:$0xf]
        %v651 = vld [vmem:[#allocation12 + $0x18] sm:$0xf]
        %v652 = vld [vmem:[#allocation12 + $0x1c] sm:$0xf]
        %v653 = vld [vmem:[%s7] sm:$0x1]
        %v655 = vlaneseq
        %v656 = vshrl.u32 %v655, 7
        %v657 = vsub.s32 0, %v656
        %v658 = vrot.slane %v653, %v657
        %v668 = vunpack.c.l.b16 %v645
        %v669 = vunpack.c.l.b16 %v646
        %v670 = vunpack.c.l.b16 %v647
        %v671 = vunpack.c.l.b16 %v648
        %v672 = vunpack.c.l.b16 %v649
        %v673 = vunpack.c.l.b16 %v650
        %v674 = vunpack.c.l.b16 %v651
        %v675 = vunpack.c.l.b16 %v652
        %v676 = vpack.c.b16 %v669, %v668
        %v677 = vpack.c.b16 %v671, %v670
        %v678 = vpack.c.b16 %v673, %v672
        %v679 = vpack.c.b16 %v675, %v674
        %v685 = vsel %vm597, %v644, 0
        %687 = vmatprep.subr.bf16.mxu0 0
        %688 = vmatpush1.bf16.msra.mxu0 %v676
        %689 = vmatprep.subr.bf16.mxu0 0
        %690 = vmatpush1.bf16.msra.mxu0 %v677
        %691 = vmatprep.subr.bf16.mxu0 0
        %692 = vmatpush1.bf16.msra.mxu0 %v678
        %693 = vmatprep.subr.bf16.mxu0 0
        %694 = vmatpush1.bf16.msra.mxu0 %v679
        %695 = vmatprep.subr.bf16.mxu0 0
        %696 = vmatpush1.bf16.msra.mxu0 0
        %697 = vmatprep.subr.bf16.mxu0 0
        %698 = vmatpush1.bf16.msra.mxu0 0
        %699 = vmatprep.subr.bf16.mxu0 0
        %700 = vmatpush1.bf16.msra.mxu0 0
        %701 = vmatprep.subr.bf16.mxu0 0
        %702 = vmatpush1.bf16.msra.mxu0 0
        %703 = vmatprep.subr.bf16.mxu0 0
        %704 = vmatpush1.bf16.msra.mxu0 0
        %705 = vmatprep.subr.bf16.mxu0 0
        %706 = vmatpush1.bf16.msra.mxu0 0
        %707 = vmatprep.subr.bf16.mxu0 0
        %708 = vmatpush1.bf16.msra.mxu0 0
        %709 = vmatprep.subr.bf16.mxu0 0
        %710 = vmatpush1.bf16.msra.mxu0 0
        %711 = vmatprep.subr.bf16.mxu0 0
        %712 = vmatpush1.bf16.msra.mxu0 0
        %713 = vmatprep.subr.bf16.mxu0 0
        %714 = vmatpush1.bf16.msra.mxu0 0
        %715 = vmatprep.subr.bf16.mxu0 0
        %716 = vmatpush1.bf16.msra.mxu0 0
        %717 = vmatprep.subr.bf16.mxu0 0
        %718 = vmatpush1.bf16.msra.mxu0 0
        %719 = vmatprep.mubr.bf16.mxu0 0
        %720 = vmatmul.mubr.bf16.gmra.mrb[0].mxu0 %v685
        %v721 = vpop.f32.mrb[0].mxu0
        %v722 = vadd.f32 %v658, %v721
        %v723 = vpop.f32.mrb[0].mxu0
        %v724 = vpop.f32.mrb[0].mxu0
        %v725 = vpop.f32.mrb[0].mxu0
        %726 = vdwg.mxu0
        %v727 = vpack.c.bf16 %v722, %v722
        %v728 = vld [vmem:[%s478] sm:$0xff]
        %v729 = vld [vmem:[%s487] sm:$0xff]
        %v730 = vadd.f32 %v728, %v729
        %v731 = vpack.c.bf16 %v730, %v730
        %732 = vrot.lane.b32.xlu0 %v589, 64
        %v733 = vpop.permute.xlu0 %732
        %734 = vrot.lane.b32.xlu0 %v590, 64
        %v735 = vpop.permute.xlu0 %734
        %736 = vrot.lane.b32.xlu0 %v591, 64
        %v737 = vpop.permute.xlu0 %736
        %738 = vrot.lane.b32.xlu0 %v592, 64
        %v739 = vpop.permute.xlu0 %738
        %744 = vrot.lane.b32.xlu0 %v571, 64
        %v745 = vpop.permute.xlu0 %744
        %v748 = vsel %vm597, %v731, 0
        %750 = vmatprep.subr.bf16.mxu0 0
        %751 = vmatpush1.bf16.msra.mxu0 %v733
        %752 = vmatprep.subr.bf16.mxu0 0
        %753 = vmatpush1.bf16.msra.mxu0 %v735
        %754 = vmatprep.subr.bf16.mxu0 0
        %755 = vmatpush1.bf16.msra.mxu0 %v737
        %756 = vmatprep.subr.bf16.mxu0 0
        %757 = vmatpush1.bf16.msra.mxu0 %v739
        %758 = vmatprep.subr.bf16.mxu0 0
        %759 = vmatpush1.bf16.msra.mxu0 0
        %760 = vmatprep.subr.bf16.mxu0 0
        %761 = vmatpush1.bf16.msra.mxu0 0
        %762 = vmatprep.subr.bf16.mxu0 0
        %763 = vmatpush1.bf16.msra.mxu0 0
        %764 = vmatprep.subr.bf16.mxu0 0
        %765 = vmatpush1.bf16.msra.mxu0 0
        %766 = vmatprep.subr.bf16.mxu0 0
        %767 = vmatpush1.bf16.msra.mxu0 0
        %768 = vmatprep.subr.bf16.mxu0 0
        %769 = vmatpush1.bf16.msra.mxu0 0
        %770 = vmatprep.subr.bf16.mxu0 0
        %771 = vmatpush1.bf16.msra.mxu0 0
        %772 = vmatprep.subr.bf16.mxu0 0
        %773 = vmatpush1.bf16.msra.mxu0 0
        %774 = vmatprep.subr.bf16.mxu0 0
        %775 = vmatpush1.bf16.msra.mxu0 0
        %776 = vmatprep.subr.bf16.mxu0 0
        %777 = vmatpush1.bf16.msra.mxu0 0
        %778 = vmatprep.subr.bf16.mxu0 0
        %779 = vmatpush1.bf16.msra.mxu0 0
        %780 = vmatprep.subr.bf16.mxu0 0
        %781 = vmatpush1.bf16.msra.mxu0 0
        %782 = vmatprep.mubr.bf16.mxu0 0
        %783 = vmatmul.mubr.bf16.gmra.mrb[0].mxu0 %v748
        %v784 = vpop.f32.mrb[0].mxu0
        %v785 = vadd.f32 %v745, %v784
        %v786 = vpop.f32.mrb[0].mxu0
        %v787 = vpop.f32.mrb[0].mxu0
        %v788 = vpop.f32.mrb[0].mxu0
        %789 = vdwg.mxu0
        %v790 = vpack.c.bf16 %v785, %v785
        %v791 = vpack.c.bf16 %v728, %v728
        %v793 = vsel %vm597, %v791, 0
        %795 = vmatprep.subr.bf16.mxu0 0
        %796 = vmatpush1.bf16.msra.mxu0 %v676
        %797 = vmatprep.subr.bf16.mxu0 0
        %798 = vmatpush1.bf16.msra.mxu0 %v677
        %799 = vmatprep.subr.bf16.mxu0 0
        %800 = vmatpush1.bf16.msra.mxu0 %v678
        %801 = vmatprep.subr.bf16.mxu0 0
        %802 = vmatpush1.bf16.msra.mxu0 %v679
        %803 = vmatprep.subr.bf16.mxu0 0
        %804 = vmatpush1.bf16.msra.mxu0 0
        %805 = vmatprep.subr.bf16.mxu0 0
        %806 = vmatpush1.bf16.msra.mxu0 0
        %807 = vmatprep.subr.bf16.mxu0 0
        %808 = vmatpush1.bf16.msra.mxu0 0
        %809 = vmatprep.subr.bf16.mxu0 0
        %810 = vmatpush1.bf16.msra.mxu0 0
        %811 = vmatprep.subr.bf16.mxu0 0
        %812 = vmatpush1.bf16.msra.mxu0 0
        %813 = vmatprep.subr.bf16.mxu0 0
        %814 = vmatpush1.bf16.msra.mxu0 0
        %815 = vmatprep.subr.bf16.mxu0 0
        %816 = vmatpush1.bf16.msra.mxu0 0
        %817 = vmatprep.subr.bf16.mxu0 0
        %818 = vmatpush1.bf16.msra.mxu0 0
        %819 = vmatprep.subr.bf16.mxu0 0
        %820 = vmatpush1.bf16.msra.mxu0 0
        %821 = vmatprep.subr.bf16.mxu0 0
        %822 = vmatpush1.bf16.msra.mxu0 0
        %823 = vmatprep.subr.bf16.mxu0 0
        %824 = vmatpush1.bf16.msra.mxu0 0
        %825 = vmatprep.subr.bf16.mxu0 0
        %826 = vmatpush1.bf16.msra.mxu0 0
        %827 = vmatprep.mubr.bf16.mxu0 0
        %828 = vmatmul.mubr.bf16.gmra.mrb[0].mxu0 %v793
        %v829 = vpop.f32.mrb[0].mxu0
        %v830 = vadd.f32 %v658, %v829
        %v831 = vpop.f32.mrb[0].mxu0
        %v832 = vpop.f32.mrb[0].mxu0
        %v833 = vpop.f32.mrb[0].mxu0
        %834 = vdwg.mxu0
        %v835 = vpack.c.bf16 %v830, %v830
        %837 = vrot.lane.b32.xlu0 %v643, 64
        %v838 = vpop.permute.xlu0 %837
        %vm839 = vcmask 130048
        %v841 = vsel %vm839, %v642, 0
        %v844 = vsel %vm839, %v838, 0
        %846 = vmatprep.subr.bf16.mxu0 0
        %847 = vmatpush1.bf16.xpose.msra.mxu0 %v844
        %848 = vmatprep.subr.bf16.mxu0 0
        %849 = vmatpush1.bf16.xpose.msra.mxu0 0
        %850 = vmatprep.subr.bf16.mxu0 0
        %851 = vmatpush1.bf16.xpose.msra.mxu0 0
        %852 = vmatprep.subr.bf16.mxu0 0
        %853 = vmatpush1.bf16.xpose.msra.mxu0 0
        %854 = vmatprep.subr.bf16.mxu0 0
        %855 = vmatpush1.bf16.xpose.msra.mxu0 0
        %856 = vmatprep.subr.bf16.mxu0 0
        %857 = vmatpush1.bf16.xpose.msra.mxu0 0
        %858 = vmatprep.subr.bf16.mxu0 0
        %859 = vmatpush1.bf16.xpose.msra.mxu0 0
        %860 = vmatprep.subr.bf16.mxu0 0
        %861 = vmatpush1.bf16.xpose.msra.mxu0 0
        %862 = vmatprep.subr.bf16.mxu0 0
        %863 = vmatpush1.bf16.xpose.msra.mxu0 0
        %864 = vmatprep.subr.bf16.mxu0 0
        %865 = vmatpush1.bf16.xpose.msra.mxu0 0
        %866 = vmatprep.subr.bf16.mxu0 0
        %867 = vmatpush1.bf16.xpose.msra.mxu0 0
        %868 = vmatprep.subr.bf16.mxu0 0
        %869 = vmatpush1.bf16.xpose.msra.mxu0 0
        %870 = vmatprep.subr.bf16.mxu0 0
        %871 = vmatpush1.bf16.xpose.msra.mxu0 0
        %872 = vmatprep.subr.bf16.mxu0 0
        %873 = vmatpush1.bf16.xpose.msra.mxu0 0
        %874 = vmatprep.subr.bf16.mxu0 0
        %875 = vmatpush1.bf16.xpose.msra.mxu0 0
        %876 = vmatprep.subr.bf16.mxu0 0
        %877 = vmatpush1.bf16.xpose.msra.mxu0 0
        %878 = vmatprep.mubr.bf16.mxu0 0
        %879 = vmatmul.mubr.bf16.gmra.mrb[0].mxu0 %v841
        %v880 = vpop.f32.mrb[0].mxu0
        %v881 = vadd.f32 0.0, %v880
        %v882 = vpop.f32.mrb[0].mxu0
        %v883 = vpop.f32.mrb[0].mxu0
        %v884 = vpop.f32.mrb[0].mxu0
        %885 = vdwg.mxu0
        %vm886 = vcmask 64512
        %v887 = vsel %vm886, %v881, -inf
        %888 = vmax.xlane.f32.xlu0 %v887
        %v889 = vpop.xlane.xlu0 %888
        %v890 = vsub.f32 %v881, %v889
        %v891 = vmul.f32 %v890, 1.442695
        %v892 = vpow.pop %v891
        %v893 = vsel %vm886, %v892, 0.0
        %894 = vadd.xlane.f32.xlu0 %v893
        %v895 = vpop.xlane.xlu0 %894
        %v896 = vpack.c.bf16 %v892, %v892
        %v898 = vsel %vm886, %v896, 0
        %vm900 = vcmask 1043456
        %v902 = vsel %vm900, %v727, 0
        %904 = vmatprep.subr.bf16.mxu0 0
        %905 = vmatpush1.bf16.msra.mxu0 %v902
        %906 = vmatprep.subr.bf16.mxu0 0
        %907 = vmatpush1.bf16.msra.mxu0 0
        %908 = vmatprep.subr.bf16.mxu0 0
        %909 = vmatpush1.bf16.msra.mxu0 0
        %910 = vmatprep.subr.bf16.mxu0 0
        %911 = vmatpush1.bf16.msra.mxu0 0
        %912 = vmatprep.subr.bf16.mxu0 0
        %913 = vmatpush1.bf16.msra.mxu0 0
        %914 = vmatprep.subr.bf16.mxu0 0
        %915 = vmatpush1.bf16.msra.mxu0 0
        %916 = vmatprep.subr.bf16.mxu0 0
        %917 = vmatpush1.bf16.msra.mxu0 0
        %918 = vmatprep.subr.bf16.mxu0 0
        %919 = vmatpush1.bf16.msra.mxu0 0
        %920 = vmatprep.subr.bf16.mxu0 0
        %921 = vmatpush1.bf16.msra.mxu0 0
        %922 = vmatprep.subr.bf16.mxu0 0
        %923 = vmatpush1.bf16.msra.mxu0 0
        %924 = vmatprep.subr.bf16.mxu0 0
        %925 = vmatpush1.bf16.msra.mxu0 0
        %926 = vmatprep.subr.bf16.mxu0 0
        %927 = vmatpush1.bf16.msra.mxu0 0
        %928 = vmatprep.subr.bf16.mxu0 0
        %929 = vmatpush1.bf16.msra.mxu0 0
        %930 = vmatprep.subr.bf16.mxu0 0
        %931 = vmatpush1.bf16.msra.mxu0 0
        %932 = vmatprep.subr.bf16.mxu0 0
        %933 = vmatpush1.bf16.msra.mxu0 0
        %934 = vmatprep.subr.bf16.mxu0 0
        %935 = vmatpush1.bf16.msra.mxu0 0
        %936 = vmatprep.mubr.bf16.mxu0 0
        %937 = vmatmul.mubr.bf16.gmra.mrb[0].mxu0 %v898
        %v938 = vpop.f32.mrb[0].mxu0
        %v939 = vadd.f32 0.0, %v938
        %v940 = vpop.f32.mrb[0].mxu0
        %v941 = vpop.f32.mrb[0].mxu0
        %v942 = vpop.f32.mrb[0].mxu0
        %943 = vdwg.mxu0
        %v945 = vsel %vm839, %v790, 0
        %947 = vmatprep.subr.bf16.mxu0 0
        %948 = vmatpush1.bf16.xpose.msra.mxu0 %v945
        %949 = vmatprep.subr.bf16.mxu0 0
        %950 = vmatpush1.bf16.xpose.msra.mxu0 0
        %951 = vmatprep.subr.bf16.mxu0 0
        %952 = vmatpush1.bf16.xpose.msra.mxu0 0
        %953 = vmatprep.subr.bf16.mxu0 0
        %954 = vmatpush1.bf16.xpose.msra.mxu0 0
        %955 = vmatprep.subr.bf16.mxu0 0
        %956 = vmatpush1.bf16.xpose.msra.mxu0 0
        %957 = vmatprep.subr.bf16.mxu0 0
        %958 = vmatpush1.bf16.xpose.msra.mxu0 0
        %959 = vmatprep.subr.bf16.mxu0 0
        %960 = vmatpush1.bf16.xpose.msra.mxu0 0
        %961 = vmatprep.subr.bf16.mxu0 0
        %962 = vmatpush1.bf16.xpose.msra.mxu0 0
        %963 = vmatprep.subr.bf16.mxu0 0
        %964 = vmatpush1.bf16.xpose.msra.mxu0 0
        %965 = vmatprep.subr.bf16.mxu0 0
        %966 = vmatpush1.bf16.xpose.msra.mxu0 0
        %967 = vmatprep.subr.bf16.mxu0 0
        %968 = vmatpush1.bf16.xpose.msra.mxu0 0
        %969 = vmatprep.subr.bf16.mxu0 0
        %970 = vmatpush1.bf16.xpose.msra.mxu0 0
        %971 = vmatprep.subr.bf16.mxu0 0
        %972 = vmatpush1.bf16.xpose.msra.mxu0 0
        %973 = vmatprep.subr.bf16.mxu0 0
        %974 = vmatpush1.bf16.xpose.msra.mxu0 0
        %975 = vmatprep.subr.bf16.mxu0 0
        %976 = vmatpush1.bf16.xpose.msra.mxu0 0
        %977 = vmatprep.subr.bf16.mxu0 0
        %978 = vmatpush1.bf16.xpose.msra.mxu0 0
        %979 = vmatprep.mubr.bf16.mxu0 0
        %980 = vmatmul.mubr.bf16.gmra.mrb[0].mxu0 %v841
        %v981 = vpop.f32.mrb[0].mxu0
        %v982 = vadd.f32 0.0, %v981
        %v983 = vpop.f32.mrb[0].mxu0
        %v984 = vpop.f32.mrb[0].mxu0
        %v985 = vpop.f32.mrb[0].mxu0
        %986 = vdwg.mxu0
        %v987 = vsel %vm886, %v982, -inf
        %988 = vmax.xlane.f32.xlu0 %v987
        %v989 = vpop.xlane.xlu0 %988
        %v990 = vmax.f32 %v889, %v989
        %v991 = vsub.f32 %v889, %v990
        %v992 = vmul.f32 %v991, 1.442695
        %v993 = vpow.pop %v992
        %v994 = vsub.f32 %v982, %v990
        %v995 = vmul.f32 %v994, 1.442695
        %v996 = vpow.pop %v995
        %v997 = vmul.f32 %v993, %v895
        %v998 = vsel %vm886, %v996, 0.0
        %999 = vadd.xlane.f32.xlu0 %v998
        %v1000 = vpop.xlane.xlu0 %999
        %v1001 = vadd.f32 %v997, %v1000
        %v1002 = vmul.f32 %v993, %v939
        %v1003 = vpack.c.bf16 %v996, %v996
        %v1005 = vsel %vm886, %v1003, 0
        %v1008 = vsel %vm900, %v835, 0
        %1010 = vmatprep.subr.bf16.mxu0 0
        %1011 = vmatpush1.bf16.msra.mxu0 %v1008
        %1012 = vmatprep.subr.bf16.mxu0 0
        %1013 = vmatpush1.bf16.msra.mxu0 0
        %1014 = vmatprep.subr.bf16.mxu0 0
        %1015 = vmatpush1.bf16.msra.mxu0 0
        %1016 = vmatprep.subr.bf16.mxu0 0
        %1017 = vmatpush1.bf16.msra.mxu0 0
        %1018 = vmatprep.subr.bf16.mxu0 0
        %1019 = vmatpush1.bf16.msra.mxu0 0
        %1020 = vmatprep.subr.bf16.mxu0 0
        %1021 = vmatpush1.bf16.msra.mxu0 0
        %1022 = vmatprep.subr.bf16.mxu0 0
        %1023 = vmatpush1.bf16.msra.mxu0 0
        %1024 = vmatprep.subr.bf16.mxu0 0
        %1025 = vmatpush1.bf16.msra.mxu0 0
        %1026 = vmatprep.subr.bf16.mxu0 0
        %1027 = vmatpush1.bf16.msra.mxu0 0
        %1028 = vmatprep.subr.bf16.mxu0 0
        %1029 = vmatpush1.bf16.msra.mxu0 0
        %1030 = vmatprep.subr.bf16.mxu0 0
        %1031 = vmatpush1.bf16.msra.mxu0 0
        %1032 = vmatprep.subr.bf16.mxu0 0
        %1033 = vmatpush1.bf16.msra.mxu0 0
        %1034 = vmatprep.subr.bf16.mxu0 0
        %1035 = vmatpush1.bf16.msra.mxu0 0
        %1036 = vmatprep.subr.bf16.mxu0 0
        %1037 = vmatpush1.bf16.msra.mxu0 0
        %1038 = vmatprep.subr.bf16.mxu0 0
        %1039 = vmatpush1.bf16.msra.mxu0 0
        %1040 = vmatprep.subr.bf16.mxu0 0
        %1041 = vmatpush1.bf16.msra.mxu0 0
        %1042 = vmatprep.mubr.bf16.mxu0 0
        %1043 = vmatmul.mubr.bf16.gmra.mrb[0].mxu0 %v1005
        %v1044 = vpop.f32.mrb[0].mxu0
        %v1045 = vadd.f32 0.0, %v1044
        %v1046 = vpop.f32.mrb[0].mxu0
        %v1047 = vpop.f32.mrb[0].mxu0
        %v1048 = vpop.f32.mrb[0].mxu0
        %1049 = vdwg.mxu0
        %v1050 = vadd.f32 %v1002, %v1045
        %v1051 = vrcp.pop %v1001
        %v1052 = vmul.f32 %v1050, %v1051
        %1053 = vst.msk [vmem:[#allocation2] sm:$0xff] %vm839, %v1052
        %1055 = vrot.lane.b32.xlu0 %v642, 112
        %v1056 = vpop.permute.xlu0 %1055
        %1057 = vrot.lane.b32.xlu0 %v643, 48
        %v1058 = vpop.permute.xlu0 %1057
        %v1060 = vsel %vm839, %v1056, 0
        %v1063 = vsel %vm839, %v1058, 0
        %1065 = vmatprep.subr.bf16.mxu0 0
        %1066 = vmatpush1.bf16.xpose.msra.mxu0 %v1063
        %1067 = vmatprep.subr.bf16.mxu0 0
        %1068 = vmatpush1.bf16.xpose.msra.mxu0 0
        %1069 = vmatprep.subr.bf16.mxu0 0
        %1070 = vmatpush1.bf16.xpose.msra.mxu0 0
        %1071 = vmatprep.subr.bf16.mxu0 0
        %1072 = vmatpush1.bf16.xpose.msra.mxu0 0
        %1073 = vmatprep.subr.bf16.mxu0 0
        %1074 = vmatpush1.bf16.xpose.msra.mxu0 0
        %1075 = vmatprep.subr.bf16.mxu0 0
        %1076 = vmatpush1.bf16.xpose.msra.mxu0 0
        %1077 = vmatprep.subr.bf16.mxu0 0
        %1078 = vmatpush1.bf16.xpose.msra.mxu0 0
        %1079 = vmatprep.subr.bf16.mxu0 0
        %1080 = vmatpush1.bf16.xpose.msra.mxu0 0
        %1081 = vmatprep.subr.bf16.mxu0 0
        %1082 = vmatpush1.bf16.xpose.msra.mxu0 0
        %1083 = vmatprep.subr.bf16.mxu0 0
        %1084 = vmatpush1.bf16.xpose.msra.mxu0 0
        %1085 = vmatprep.subr.bf16.mxu0 0
        %1086 = vmatpush1.bf16.xpose.msra.mxu0 0
        %1087 = vmatprep.subr.bf16.mxu0 0
        %1088 = vmatpush1.bf16.xpose.msra.mxu0 0
        %1089 = vmatprep.subr.bf16.mxu0 0
        %1090 = vmatpush1.bf16.xpose.msra.mxu0 0
        %1091 = vmatprep.subr.bf16.mxu0 0
        %1092 = vmatpush1.bf16.xpose.msra.mxu0 0
        %1093 = vmatprep.subr.bf16.mxu0 0
        %1094 = vmatpush1.bf16.xpose.msra.mxu0 0
        %1095 = vmatprep.subr.bf16.mxu0 0
        %1096 = vmatpush1.bf16.xpose.msra.mxu0 0
        %1097 = vmatprep.mubr.bf16.mxu0 0
        %1098 = vmatmul.mubr.bf16.gmra.mrb[0].mxu0 %v1060
        %v1099 = vpop.f32.mrb[0].mxu0
        %v1100 = vadd.f32 0.0, %v1099
        %v1101 = vpop.f32.mrb[0].mxu0
        %v1102 = vpop.f32.mrb[0].mxu0
        %v1103 = vpop.f32.mrb[0].mxu0
        %1104 = vdwg.mxu0
        %v1105 = vsel %vm886, %v1100, -inf
        %1106 = vmax.xlane.f32.xlu0 %v1105
        %v1107 = vpop.xlane.xlu0 %1106
        %v1108 = vsub.f32 %v1100, %v1107
        %v1109 = vmul.f32 %v1108, 1.442695
        %v1110 = vpow.pop %v1109
        %v1111 = vsel %vm886, %v1110, 0.0
        %1112 = vadd.xlane.f32.xlu0 %v1111
        %v1113 = vpop.xlane.xlu0 %1112
        %v1114 = vpack.c.bf16 %v1110, %v1110
        %1116 = vrot.lane.b32.xlu0 %v727, 112
        %v1117 = vpop.permute.xlu0 %1116
        %v1119 = vsel %vm886, %v1114, 0
        %v1122 = vsel %vm900, %v1117, 0
        %1124 = vmatprep.subr.bf16.mxu0 0
        %1125 = vmatpush1.bf16.msra.mxu0 %v1122
        %1126 = vmatprep.subr.bf16.mxu0 0
        %1127 = vmatpush1.bf16.msra.mxu0 0
        %1128 = vmatprep.subr.bf16.mxu0 0
        %1129 = vmatpush1.bf16.msra.mxu0 0
        %1130 = vmatprep.subr.bf16.mxu0 0
        %1131 = vmatpush1.bf16.msra.mxu0 0
        %1132 = vmatprep.subr.bf16.mxu0 0
        %1133 = vmatpush1.bf16.msra.mxu0 0
        %1134 = vmatprep.subr.bf16.mxu0 0
        %1135 = vmatpush1.bf16.msra.mxu0 0
        %1136 = vmatprep.subr.bf16.mxu0 0
        %1137 = vmatpush1.bf16.msra.mxu0 0
        %1138 = vmatprep.subr.bf16.mxu0 0
        %1139 = vmatpush1.bf16.msra.mxu0 0
        %1140 = vmatprep.subr.bf16.mxu0 0
        %1141 = vmatpush1.bf16.msra.mxu0 0
        %1142 = vmatprep.subr.bf16.mxu0 0
        %1143 = vmatpush1.bf16.msra.mxu0 0
        %1144 = vmatprep.subr.bf16.mxu0 0
        %1145 = vmatpush1.bf16.msra.mxu0 0
        %1146 = vmatprep.subr.bf16.mxu0 0
        %1147 = vmatpush1.bf16.msra.mxu0 0
        %1148 = vmatprep.subr.bf16.mxu0 0
        %1149 = vmatpush1.bf16.msra.mxu0 0
        %1150 = vmatprep.subr.bf16.mxu0 0
        %1151 = vmatpush1.bf16.msra.mxu0 0
        %1152 = vmatprep.subr.bf16.mxu0 0
        %1153 = vmatpush1.bf16.msra.mxu0 0
        %1154 = vmatprep.subr.bf16.mxu0 0
        %1155 = vmatpush1.bf16.msra.mxu0 0
        %1156 = vmatprep.mubr.bf16.mxu0 0
        %1157 = vmatmul.mubr.bf16.gmra.mrb[0].mxu0 %v1119
        %v1158 = vpop.f32.mrb[0].mxu0
        %v1159 = vadd.f32 0.0, %v1158
        %v1160 = vpop.f32.mrb[0].mxu0
        %v1161 = vpop.f32.mrb[0].mxu0
        %v1162 = vpop.f32.mrb[0].mxu0
        %1163 = vdwg.mxu0
        %1165 = vrot.lane.b32.xlu0 %v790, 112
        %v1166 = vpop.permute.xlu0 %1165
        %v1168 = vsel %vm839, %v1166, 0
        %1170 = vmatprep.subr.bf16.mxu0 0
        %1171 = vmatpush1.bf16.xpose.msra.mxu0 %v1168
        %1172 = vmatprep.subr.bf16.mxu0 0
        %1173 = vmatpush1.bf16.xpose.msra.mxu0 0
        %1174 = vmatprep.subr.bf16.mxu0 0
        %1175 = vmatpush1.bf16.xpose.msra.mxu0 0
        %1176 = vmatprep.subr.bf16.mxu0 0
        %1177 = vmatpush1.bf16.xpose.msra.mxu0 0
        %1178 = vmatprep.subr.bf16.mxu0 0
        %1179 = vmatpush1.bf16.xpose.msra.mxu0 0
        %1180 = vmatprep.subr.bf16.mxu0 0
        %1181 = vmatpush1.bf16.xpose.msra.mxu0 0
        %1182 = vmatprep.subr.bf16.mxu0 0
        %1183 = vmatpush1.bf16.xpose.msra.mxu0 0
        %1184 = vmatprep.subr.bf16.mxu0 0
        %1185 = vmatpush1.bf16.xpose.msra.mxu0 0
        %1186 = vmatprep.subr.bf16.mxu0 0
        %1187 = vmatpush1.bf16.xpose.msra.mxu0 0
        %1188 = vmatprep.subr.bf16.mxu0 0
        %1189 = vmatpush1.bf16.xpose.msra.mxu0 0
        %1190 = vmatprep.subr.bf16.mxu0 0
        %1191 = vmatpush1.bf16.xpose.msra.mxu0 0
        %1192 = vmatprep.subr.bf16.mxu0 0
        %1193 = vmatpush1.bf16.xpose.msra.mxu0 0
        %1194 = vmatprep.subr.bf16.mxu0 0
        %1195 = vmatpush1.bf16.xpose.msra.mxu0 0
        %1196 = vmatprep.subr.bf16.mxu0 0
        %1197 = vmatpush1.bf16.xpose.msra.mxu0 0
        %1198 = vmatprep.subr.bf16.mxu0 0
        %1199 = vmatpush1.bf16.xpose.msra.mxu0 0
        %1200 = vmatprep.subr.bf16.mxu0 0
        %1201 = vmatpush1.bf16.xpose.msra.mxu0 0
        %1202 = vmatprep.mubr.bf16.mxu0 0
        %1203 = vmatmul.mubr.bf16.gmra.mrb[0].mxu0 %v1060
        %v1204 = vpop.f32.mrb[0].mxu0
        %v1205 = vadd.f32 0.0, %v1204
        %v1206 = vpop.f32.mrb[0].mxu0
        %v1207 = vpop.f32.mrb[0].mxu0
        %v1208 = vpop.f32.mrb[0].mxu0
        %1209 = vdwg.mxu0
        %v1210 = vsel %vm886, %v1205, -inf
        %1211 = vmax.xlane.f32.xlu0 %v1210
        %v1212 = vpop.xlane.xlu0 %1211
        %v1213 = vmax.f32 %v1107, %v1212
        %v1214 = vsub.f32 %v1107, %v1213
        %v1215 = vmul.f32 %v1214, 1.442695
        %v1216 = vpow.pop %v1215
        %v1217 = vsub.f32 %v1205, %v1213
        %v1218 = vmul.f32 %v1217, 1.442695
        %v1219 = vpow.pop %v1218
        %v1220 = vmul.f32 %v1216, %v1113
        %v1221 = vsel %vm886, %v1219, 0.0
        %1222 = vadd.xlane.f32.xlu0 %v1221
        %v1223 = vpop.xlane.xlu0 %1222
        %v1224 = vadd.f32 %v1220, %v1223
        %v1225 = vmul.f32 %v1216, %v1159
        %v1226 = vpack.c.bf16 %v1219, %v1219
        %1228 = vrot.lane.b32.xlu0 %v835, 112
        %v1229 = vpop.permute.xlu0 %1228
        %v1231 = vsel %vm886, %v1226, 0
        %v1234 = vsel %vm900, %v1229, 0
        %1236 = vmatprep.subr.bf16.mxu0 0
        %1237 = vmatpush1.bf16.msra.mxu0 %v1234
        %1238 = vmatprep.subr.bf16.mxu0 0
        %1239 = vmatpush1.bf16.msra.mxu0 0
        %1240 = vmatprep.subr.bf16.mxu0 0
        %1241 = vmatpush1.bf16.msra.mxu0 0
        %1242 = vmatprep.subr.bf16.mxu0 0
        %1243 = vmatpush1.bf16.msra.mxu0 0
        %1244 = vmatprep.subr.bf16.mxu0 0
        %1245 = vmatpush1.bf16.msra.mxu0 0
        %1246 = vmatprep.subr.bf16.mxu0 0
        %1247 = vmatpush1.bf16.msra.mxu0 0
        %1248 = vmatprep.subr.bf16.mxu0 0
        %1249 = vmatpush1.bf16.msra.mxu0 0
        %1250 = vmatprep.subr.bf16.mxu0 0
        %1251 = vmatpush1.bf16.msra.mxu0 0
        %1252 = vmatprep.subr.bf16.mxu0 0
        %1253 = vmatpush1.bf16.msra.mxu0 0
        %1254 = vmatprep.subr.bf16.mxu0 0
        %1255 = vmatpush1.bf16.msra.mxu0 0
        %1256 = vmatprep.subr.bf16.mxu0 0
        %1257 = vmatpush1.bf16.msra.mxu0 0
        %1258 = vmatprep.subr.bf16.mxu0 0
        %1259 = vmatpush1.bf16.msra.mxu0 0
        %1260 = vmatprep.subr.bf16.mxu0 0
        %1261 = vmatpush1.bf16.msra.mxu0 0
        %1262 = vmatprep.subr.bf16.mxu0 0
        %1263 = vmatpush1.bf16.msra.mxu0 0
        %1264 = vmatprep.subr.bf16.mxu0 0
        %1265 = vmatpush1.bf16.msra.mxu0 0
        %1266 = vmatprep.subr.bf16.mxu0 0
        %1267 = vmatpush1.bf16.msra.mxu0 0
        %1268 = vmatprep.mubr.bf16.mxu0 0
        %1269 = vmatmul.mubr.bf16.gmra.mrb[0].mxu0 %v1231
        %v1270 = vpop.f32.mrb[0].mxu0
        %v1271 = vadd.f32 0.0, %v1270
        %v1272 = vpop.f32.mrb[0].mxu0
        %v1273 = vpop.f32.mrb[0].mxu0
        %v1274 = vpop.f32.mrb[0].mxu0
        %1275 = vdwg.mxu0
        %v1276 = vadd.f32 %v1225, %v1271
        %v1277 = vrcp.pop %v1224
        %v1278 = vmul.f32 %v1276, %v1277
        %1280 = vrot.lane.b32.xlu0 %v1278, 16
        %v1281 = vpop.permute.xlu0 %1280
        %vm1283 = vcmask 261248
        %1284 = vst.msk [vmem:[#allocation2] sm:$0xff] %vm1283, %v1281
        %1285 = vrot.lane.b32.xlu0 %v642, 96
        %v1286 = vpop.permute.xlu0 %1285
        %1287 = vrot.lane.b32.xlu0 %v643, 32
        %v1288 = vpop.permute.xlu0 %1287
        %v1290 = vsel %vm839, %v1286, 0
        %v1293 = vsel %vm839, %v1288, 0
        %1295 = vmatprep.subr.bf16.mxu0 0
        %1296 = vmatpush1.bf16.xpose.msra.mxu0 %v1293
        %1297 = vmatprep.subr.bf16.mxu0 0
        %1298 = vmatpush1.bf16.xpose.msra.mxu0 0
        %1299 = vmatprep.subr.bf16.mxu0 0
        %1300 = vmatpush1.bf16.xpose.msra.mxu0 0
        %1301 = vmatprep.subr.bf16.mxu0 0
        %1302 = vmatpush1.bf16.xpose.msra.mxu0 0
        %1303 = vmatprep.subr.bf16.mxu0 0
        %1304 = vmatpush1.bf16.xpose.msra.mxu0 0
        %1305 = vmatprep.subr.bf16.mxu0 0
        %1306 = vmatpush1.bf16.xpose.msra.mxu0 0
        %1307 = vmatprep.subr.bf16.mxu0 0
        %1308 = vmatpush1.bf16.xpose.msra.mxu0 0
        %1309 = vmatprep.subr.bf16.mxu0 0
        %1310 = vmatpush1.bf16.xpose.msra.mxu0 0
        %1311 = vmatprep.subr.bf16.mxu0 0
        %1312 = vmatpush1.bf16.xpose.msra.mxu0 0
        %1313 = vmatprep.subr.bf16.mxu0 0
        %1314 = vmatpush1.bf16.xpose.msra.mxu0 0
        %1315 = vmatprep.subr.bf16.mxu0 0
        %1316 = vmatpush1.bf16.xpose.msra.mxu0 0
        %1317 = vmatprep.subr.bf16.mxu0 0
        %1318 = vmatpush1.bf16.xpose.msra.mxu0 0
        %1319 = vmatprep.subr.bf16.mxu0 0
        %1320 = vmatpush1.bf16.xpose.msra.mxu0 0
        %1321 = vmatprep.subr.bf16.mxu0 0
        %1322 = vmatpush1.bf16.xpose.msra.mxu0 0
        %1323 = vmatprep.subr.bf16.mxu0 0
        %1324 = vmatpush1.bf16.xpose.msra.mxu0 0
        %1325 = vmatprep.subr.bf16.mxu0 0
        %1326 = vmatpush1.bf16.xpose.msra.mxu0 0
        %1327 = vmatprep.mubr.bf16.mxu0 0
        %1328 = vmatmul.mubr.bf16.gmra.mrb[0].mxu0 %v1290
        %v1329 = vpop.f32.mrb[0].mxu0
        %v1330 = vadd.f32 0.0, %v1329
        %v1331 = vpop.f32.mrb[0].mxu0
        %v1332 = vpop.f32.mrb[0].mxu0
        %v1333 = vpop.f32.mrb[0].mxu0
        %1334 = vdwg.mxu0
        %v1335 = vsel %vm886, %v1330, -inf
        %1336 = vmax.xlane.f32.xlu0 %v1335
        %v1337 = vpop.xlane.xlu0 %1336
        %v1338 = vsub.f32 %v1330, %v1337
        %v1339 = vmul.f32 %v1338, 1.442695
        %v1340 = vpow.pop %v1339
        %v1341 = vsel %vm886, %v1340, 0.0
        %1342 = vadd.xlane.f32.xlu0 %v1341
        %v1343 = vpop.xlane.xlu0 %1342
        %v1344 = vpack.c.bf16 %v1340, %v1340
        %1345 = vrot.lane.b32.xlu0 %v727, 96
        %v1346 = vpop.permute.xlu0 %1345
        %v1348 = vsel %vm886, %v1344, 0
        %v1351 = vsel %vm900, %v1346, 0
        %1353 = vmatprep.subr.bf16.mxu0 0
        %1354 = vmatpush1.bf16.msra.mxu0 %v1351
        %1355 = vmatprep.subr.bf16.mxu0 0
        %1356 = vmatpush1.bf16.msra.mxu0 0
        %1357 = vmatprep.subr.bf16.mxu0 0
        %1358 = vmatpush1.bf16.msra.mxu0 0
        %1359 = vmatprep.subr.bf16.mxu0 0
        %1360 = vmatpush1.bf16.msra.mxu0 0
        %1361 = vmatprep.subr.bf16.mxu0 0
        %1362 = vmatpush1.bf16.msra.mxu0 0
        %1363 = vmatprep.subr.bf16.mxu0 0
        %1364 = vmatpush1.bf16.msra.mxu0 0
        %1365 = vmatprep.subr.bf16.mxu0 0
        %1366 = vmatpush1.bf16.msra.mxu0 0
        %1367 = vmatprep.subr.bf16.mxu0 0
        %1368 = vmatpush1.bf16.msra.mxu0 0
        %1369 = vmatprep.subr.bf16.mxu0 0
        %1370 = vmatpush1.bf16.msra.mxu0 0
        %1371 = vmatprep.subr.bf16.mxu0 0
        %1372 = vmatpush1.bf16.msra.mxu0 0
        %1373 = vmatprep.subr.bf16.mxu0 0
        %1374 = vmatpush1.bf16.msra.mxu0 0
        %1375 = vmatprep.subr.bf16.mxu0 0
        %1376 = vmatpush1.bf16.msra.mxu0 0
        %1377 = vmatprep.subr.bf16.mxu0 0
        %1378 = vmatpush1.bf16.msra.mxu0 0
        %1379 = vmatprep.subr.bf16.mxu0 0
        %1380 = vmatpush1.bf16.msra.mxu0 0
        %1381 = vmatprep.subr.bf16.mxu0 0
        %1382 = vmatpush1.bf16.msra.mxu0 0
        %1383 = vmatprep.subr.bf16.mxu0 0
        %1384 = vmatpush1.bf16.msra.mxu0 0
        %1385 = vmatprep.mubr.bf16.mxu0 0
        %1386 = vmatmul.mubr.bf16.gmra.mrb[0].mxu0 %v1348
        %v1387 = vpop.f32.mrb[0].mxu0
        %v1388 = vadd.f32 0.0, %v1387
        %v1389 = vpop.f32.mrb[0].mxu0
        %v1390 = vpop.f32.mrb[0].mxu0
        %v1391 = vpop.f32.mrb[0].mxu0
        %1392 = vdwg.mxu0
        %1393 = vrot.lane.b32.xlu0 %v790, 96
        %v1394 = vpop.permute.xlu0 %1393
        %v1396 = vsel %vm839, %v1394, 0
        %1398 = vmatprep.subr.bf16.mxu0 0
        %1399 = vmatpush1.bf16.xpose.msra.mxu0 %v1396
        %1400 = vmatprep.subr.bf16.mxu0 0
        %1401 = vmatpush1.bf16.xpose.msra.mxu0 0
        %1402 = vmatprep.subr.bf16.mxu0 0
        %1403 = vmatpush1.bf16.xpose.msra.mxu0 0
        %1404 = vmatprep.subr.bf16.mxu0 0
        %1405 = vmatpush1.bf16.xpose.msra.mxu0 0
        %1406 = vmatprep.subr.bf16.mxu0 0
        %1407 = vmatpush1.bf16.xpose.msra.mxu0 0
        %1408 = vmatprep.subr.bf16.mxu0 0
        %1409 = vmatpush1.bf16.xpose.msra.mxu0 0
        %1410 = vmatprep.subr.bf16.mxu0 0
        %1411 = vmatpush1.bf16.xpose.msra.mxu0 0
        %1412 = vmatprep.subr.bf16.mxu0 0
        %1413 = vmatpush1.bf16.xpose.msra.mxu0 0
        %1414 = vmatprep.subr.bf16.mxu0 0
        %1415 = vmatpush1.bf16.xpose.msra.mxu0 0
        %1416 = vmatprep.subr.bf16.mxu0 0
        %1417 = vmatpush1.bf16.xpose.msra.mxu0 0
        %1418 = vmatprep.subr.bf16.mxu0 0
        %1419 = vmatpush1.bf16.xpose.msra.mxu0 0
        %1420 = vmatprep.subr.bf16.mxu0 0
        %1421 = vmatpush1.bf16.xpose.msra.mxu0 0
        %1422 = vmatprep.subr.bf16.mxu0 0
        %1423 = vmatpush1.bf16.xpose.msra.mxu0 0
        %1424 = vmatprep.subr.bf16.mxu0 0
        %1425 = vmatpush1.bf16.xpose.msra.mxu0 0
        %1426 = vmatprep.subr.bf16.mxu0 0
        %1427 = vmatpush1.bf16.xpose.msra.mxu0 0
        %1428 = vmatprep.subr.bf16.mxu0 0
        %1429 = vmatpush1.bf16.xpose.msra.mxu0 0
        %1430 = vmatprep.mubr.bf16.mxu0 0
        %1431 = vmatmul.mubr.bf16.gmra.mrb[0].mxu0 %v1290
        %v1432 = vpop.f32.mrb[0].mxu0
        %v1433 = vadd.f32 0.0, %v1432
        %v1434 = vpop.f32.mrb[0].mxu0
        %v1435 = vpop.f32.mrb[0].mxu0
        %v1436 = vpop.f32.mrb[0].mxu0
        %1437 = vdwg.mxu0
        %v1438 = vsel %vm886, %v1433, -inf
        %1439 = vmax.xlane.f32.xlu0 %v1438
        %v1440 = vpop.xlane.xlu0 %1439
        %v1441 = vmax.f32 %v1337, %v1440
        %v1442 = vsub.f32 %v1337, %v1441
        %v1443 = vmul.f32 %v1442, 1.442695
        %v1444 = vpow.pop %v1443
        %v1445 = vsub.f32 %v1433, %v1441
        %v1446 = vmul.f32 %v1445, 1.442695
        %v1447 = vpow.pop %v1446
        %v1448 = vmul.f32 %v1444, %v1343
        %v1449 = vsel %vm886, %v1447, 0.0
        %1450 = vadd.xlane.f32.xlu0 %v1449
        %v1451 = vpop.xlane.xlu0 %1450
        %v1452 = vadd.f32 %v1448, %v1451
        %v1453 = vmul.f32 %v1444, %v1388
        %v1454 = vpack.c.bf16 %v1447, %v1447
        %1455 = vrot.lane.b32.xlu0 %v835, 96
        %v1456 = vpop.permute.xlu0 %1455
        %v1458 = vsel %vm886, %v1454, 0
        %v1461 = vsel %vm900, %v1456, 0
        %1463 = vmatprep.subr.bf16.mxu0 0
        %1464 = vmatpush1.bf16.msra.mxu0 %v1461
        %1465 = vmatprep.subr.bf16.mxu0 0
        %1466 = vmatpush1.bf16.msra.mxu0 0
        %1467 = vmatprep.subr.bf16.mxu0 0
        %1468 = vmatpush1.bf16.msra.mxu0 0
        %1469 = vmatprep.subr.bf16.mxu0 0
        %1470 = vmatpush1.bf16.msra.mxu0 0
        %1471 = vmatprep.subr.bf16.mxu0 0
        %1472 = vmatpush1.bf16.msra.mxu0 0
        %1473 = vmatprep.subr.bf16.mxu0 0
        %1474 = vmatpush1.bf16.msra.mxu0 0
        %1475 = vmatprep.subr.bf16.mxu0 0
        %1476 = vmatpush1.bf16.msra.mxu0 0
        %1477 = vmatprep.subr.bf16.mxu0 0
        %1478 = vmatpush1.bf16.msra.mxu0 0
        %1479 = vmatprep.subr.bf16.mxu0 0
        %1480 = vmatpush1.bf16.msra.mxu0 0
        %1481 = vmatprep.subr.bf16.mxu0 0
        %1482 = vmatpush1.bf16.msra.mxu0 0
        %1483 = vmatprep.subr.bf16.mxu0 0
        %1484 = vmatpush1.bf16.msra.mxu0 0
        %1485 = vmatprep.subr.bf16.mxu0 0
        %1486 = vmatpush1.bf16.msra.mxu0 0
        %1487 = vmatprep.subr.bf16.mxu0 0
        %1488 = vmatpush1.bf16.msra.mxu0 0
        %1489 = vmatprep.subr.bf16.mxu0 0
        %1490 = vmatpush1.bf16.msra.mxu0 0
        %1491 = vmatprep.subr.bf16.mxu0 0
        %1492 = vmatpush1.bf16.msra.mxu0 0
        %1493 = vmatprep.subr.bf16.mxu0 0
        %1494 = vmatpush1.bf16.msra.mxu0 0
        %1495 = vmatprep.mubr.bf16.mxu0 0
        %1496 = vmatmul.mubr.bf16.gmra.mrb[0].mxu0 %v1458
        %v1497 = vpop.f32.mrb[0].mxu0
        %v1498 = vadd.f32 0.0, %v1497
        %v1499 = vpop.f32.mrb[0].mxu0
        %v1500 = vpop.f32.mrb[0].mxu0
        %v1501 = vpop.f32.mrb[0].mxu0
        %1502 = vdwg.mxu0
        %v1503 = vadd.f32 %v1453, %v1498
        %v1504 = vrcp.pop %v1452
        %v1505 = vmul.f32 %v1503, %v1504
        %1507 = vrot.lane.b32.xlu0 %v1505, 32
        %v1508 = vpop.permute.xlu0 %1507
        %vm1510 = vcmask 392448
        %1511 = vst.msk [vmem:[#allocation2] sm:$0xff] %vm1510, %v1508
        %1512 = vrot.lane.b32.xlu0 %v642, 80
        %v1513 = vpop.permute.xlu0 %1512
        %1514 = vrot.lane.b32.xlu0 %v643, 16
        %v1515 = vpop.permute.xlu0 %1514
        %v1517 = vsel %vm839, %v1513, 0
        %v1520 = vsel %vm839, %v1515, 0
        %1522 = vmatprep.subr.bf16.mxu0 0
        %1523 = vmatpush1.bf16.xpose.msra.mxu0 %v1520
        %1524 = vmatprep.subr.bf16.mxu0 0
        %1525 = vmatpush1.bf16.xpose.msra.mxu0 0
        %1526 = vmatprep.subr.bf16.mxu0 0
        %1527 = vmatpush1.bf16.xpose.msra.mxu0 0
        %1528 = vmatprep.subr.bf16.mxu0 0
        %1529 = vmatpush1.bf16.xpose.msra.mxu0 0
        %1530 = vmatprep.subr.bf16.mxu0 0
        %1531 = vmatpush1.bf16.xpose.msra.mxu0 0
        %1532 = vmatprep.subr.bf16.mxu0 0
        %1533 = vmatpush1.bf16.xpose.msra.mxu0 0
        %1534 = vmatprep.subr.bf16.mxu0 0
        %1535 = vmatpush1.bf16.xpose.msra.mxu0 0
        %1536 = vmatprep.subr.bf16.mxu0 0
        %1537 = vmatpush1.bf16.xpose.msra.mxu0 0
        %1538 = vmatprep.subr.bf16.mxu0 0
        %1539 = vmatpush1.bf16.xpose.msra.mxu0 0
        %1540 = vmatprep.subr.bf16.mxu0 0
        %1541 = vmatpush1.bf16.xpose.msra.mxu0 0
        %1542 = vmatprep.subr.bf16.mxu0 0
        %1543 = vmatpush1.bf16.xpose.msra.mxu0 0
        %1544 = vmatprep.subr.bf16.mxu0 0
        %1545 = vmatpush1.bf16.xpose.msra.mxu0 0
        %1546 = vmatprep.subr.bf16.mxu0 0
        %1547 = vmatpush1.bf16.xpose.msra.mxu0 0
        %1548 = vmatprep.subr.bf16.mxu0 0
        %1549 = vmatpush1.bf16.xpose.msra.mxu0 0
        %1550 = vmatprep.subr.bf16.mxu0 0
        %1551 = vmatpush1.bf16.xpose.msra.mxu0 0
        %1552 = vmatprep.subr.bf16.mxu0 0
        %1553 = vmatpush1.bf16.xpose.msra.mxu0 0
        %1554 = vmatprep.mubr.bf16.mxu0 0
        %1555 = vmatmul.mubr.bf16.gmra.mrb[0].mxu0 %v1517
        %v1556 = vpop.f32.mrb[0].mxu0
        %v1557 = vadd.f32 0.0, %v1556
        %v1558 = vpop.f32.mrb[0].mxu0
        %v1559 = vpop.f32.mrb[0].mxu0
        %v1560 = vpop.f32.mrb[0].mxu0
        %1561 = vdwg.mxu0
        %v1562 = vsel %vm886, %v1557, -inf
        %1563 = vmax.xlane.f32.xlu0 %v1562
        %v1564 = vpop.xlane.xlu0 %1563
        %v1565 = vsub.f32 %v1557, %v1564
        %v1566 = vmul.f32 %v1565, 1.442695
        %v1567 = vpow.pop %v1566
        %v1568 = vsel %vm886, %v1567, 0.0
        %1569 = vadd.xlane.f32.xlu0 %v1568
        %v1570 = vpop.xlane.xlu0 %1569
        %v1571 = vpack.c.bf16 %v1567, %v1567
        %1572 = vrot.lane.b32.xlu0 %v727, 80
        %v1573 = vpop.permute.xlu0 %1572
        %v1575 = vsel %vm886, %v1571, 0
        %v1578 = vsel %vm900, %v1573, 0
        %1580 = vmatprep.subr.bf16.mxu0 0
        %1581 = vmatpush1.bf16.msra.mxu0 %v1578
        %1582 = vmatprep.subr.bf16.mxu0 0
        %1583 = vmatpush1.bf16.msra.mxu0 0
        %1584 = vmatprep.subr.bf16.mxu0 0
        %1585 = vmatpush1.bf16.msra.mxu0 0
        %1586 = vmatprep.subr.bf16.mxu0 0
        %1587 = vmatpush1.bf16.msra.mxu0 0
        %1588 = vmatprep.subr.bf16.mxu0 0
        %1589 = vmatpush1.bf16.msra.mxu0 0
        %1590 = vmatprep.subr.bf16.mxu0 0
        %1591 = vmatpush1.bf16.msra.mxu0 0
        %1592 = vmatprep.subr.bf16.mxu0 0
        %1593 = vmatpush1.bf16.msra.mxu0 0
        %1594 = vmatprep.subr.bf16.mxu0 0
        %1595 = vmatpush1.bf16.msra.mxu0 0
        %1596 = vmatprep.subr.bf16.mxu0 0
        %1597 = vmatpush1.bf16.msra.mxu0 0
        %1598 = vmatprep.subr.bf16.mxu0 0
        %1599 = vmatpush1.bf16.msra.mxu0 0
        %1600 = vmatprep.subr.bf16.mxu0 0
        %1601 = vmatpush1.bf16.msra.mxu0 0
        %1602 = vmatprep.subr.bf16.mxu0 0
        %1603 = vmatpush1.bf16.msra.mxu0 0
        %1604 = vmatprep.subr.bf16.mxu0 0
        %1605 = vmatpush1.bf16.msra.mxu0 0
        %1606 = vmatprep.subr.bf16.mxu0 0
        %1607 = vmatpush1.bf16.msra.mxu0 0
        %1608 = vmatprep.subr.bf16.mxu0 0
        %1609 = vmatpush1.bf16.msra.mxu0 0
        %1610 = vmatprep.subr.bf16.mxu0 0
        %1611 = vmatpush1.bf16.msra.mxu0 0
        %1612 = vmatprep.mubr.bf16.mxu0 0
        %1613 = vmatmul.mubr.bf16.gmra.mrb[0].mxu0 %v1575
        %v1614 = vpop.f32.mrb[0].mxu0
        %v1615 = vadd.f32 0.0, %v1614
        %v1616 = vpop.f32.mrb[0].mxu0
        %v1617 = vpop.f32.mrb[0].mxu0
        %v1618 = vpop.f32.mrb[0].mxu0
        %1619 = vdwg.mxu0
        %1620 = vrot.lane.b32.xlu0 %v790, 80
        %v1621 = vpop.permute.xlu0 %1620
        %v1623 = vsel %vm839, %v1621, 0
        %1625 = vmatprep.subr.bf16.mxu0 0
        %1626 = vmatpush1.bf16.xpose.msra.mxu0 %v1623
        %1627 = vmatprep.subr.bf16.mxu0 0
        %1628 = vmatpush1.bf16.xpose.msra.mxu0 0
        %1629 = vmatprep.subr.bf16.mxu0 0
        %1630 = vmatpush1.bf16.xpose.msra.mxu0 0
        %1631 = vmatprep.subr.bf16.mxu0 0
        %1632 = vmatpush1.bf16.xpose.msra.mxu0 0
        %1633 = vmatprep.subr.bf16.mxu0 0
        %1634 = vmatpush1.bf16.xpose.msra.mxu0 0
        %1635 = vmatprep.subr.bf16.mxu0 0
        %1636 = vmatpush1.bf16.xpose.msra.mxu0 0
        %1637 = vmatprep.subr.bf16.mxu0 0
        %1638 = vmatpush1.bf16.xpose.msra.mxu0 0
        %1639 = vmatprep.subr.bf16.mxu0 0
        %1640 = vmatpush1.bf16.xpose.msra.mxu0 0
        %1641 = vmatprep.subr.bf16.mxu0 0
        %1642 = vmatpush1.bf16.xpose.msra.mxu0 0
        %1643 = vmatprep.subr.bf16.mxu0 0
        %1644 = vmatpush1.bf16.xpose.msra.mxu0 0
        %1645 = vmatprep.subr.bf16.mxu0 0
        %1646 = vmatpush1.bf16.xpose.msra.mxu0 0
        %1647 = vmatprep.subr.bf16.mxu0 0
        %1648 = vmatpush1.bf16.xpose.msra.mxu0 0
        %1649 = vmatprep.subr.bf16.mxu0 0
        %1650 = vmatpush1.bf16.xpose.msra.mxu0 0
        %1651 = vmatprep.subr.bf16.mxu0 0
        %1652 = vmatpush1.bf16.xpose.msra.mxu0 0
        %1653 = vmatprep.subr.bf16.mxu0 0
        %1654 = vmatpush1.bf16.xpose.msra.mxu0 0
        %1655 = vmatprep.subr.bf16.mxu0 0
        %1656 = vmatpush1.bf16.xpose.msra.mxu0 0
        %1657 = vmatprep.mubr.bf16.mxu0 0
        %1658 = vmatmul.mubr.bf16.gmra.mrb[0].mxu0 %v1517
        %v1659 = vpop.f32.mrb[0].mxu0
        %v1660 = vadd.f32 0.0, %v1659
        %v1661 = vpop.f32.mrb[0].mxu0
        %v1662 = vpop.f32.mrb[0].mxu0
        %v1663 = vpop.f32.mrb[0].mxu0
        %1664 = vdwg.mxu0
        %v1665 = vsel %vm886, %v1660, -inf
        %1666 = vmax.xlane.f32.xlu0 %v1665
        %v1667 = vpop.xlane.xlu0 %1666
        %v1668 = vmax.f32 %v1564, %v1667
        %v1669 = vsub.f32 %v1564, %v1668
        %v1670 = vmul.f32 %v1669, 1.442695
        %v1671 = vpow.pop %v1670
        %v1672 = vsub.f32 %v1660, %v1668
        %v1673 = vmul.f32 %v1672, 1.442695
        %v1674 = vpow.pop %v1673
        %v1675 = vmul.f32 %v1671, %v1570
        %v1676 = vsel %vm886, %v1674, 0.0
        %1677 = vadd.xlane.f32.xlu0 %v1676
        %v1678 = vpop.xlane.xlu0 %1677
        %v1679 = vadd.f32 %v1675, %v1678
        %v1680 = vmul.f32 %v1671, %v1615
        %v1681 = vpack.c.bf16 %v1674, %v1674
        %1682 = vrot.lane.b32.xlu0 %v835, 80
        %v1683 = vpop.permute.xlu0 %1682
        %v1685 = vsel %vm886, %v1681, 0
        %v1688 = vsel %vm900, %v1683, 0
        %1690 = vmatprep.subr.bf16.mxu0 0
        %1691 = vmatpush1.bf16.msra.mxu0 %v1688
        %1692 = vmatprep.subr.bf16.mxu0 0
        %1693 = vmatpush1.bf16.msra.mxu0 0
        %1694 = vmatprep.subr.bf16.mxu0 0
        %1695 = vmatpush1.bf16.msra.mxu0 0
        %1696 = vmatprep.subr.bf16.mxu0 0
        %1697 = vmatpush1.bf16.msra.mxu0 0
        %1698 = vmatprep.subr.bf16.mxu0 0
        %1699 = vmatpush1.bf16.msra.mxu0 0
        %1700 = vmatprep.subr.bf16.mxu0 0
        %1701 = vmatpush1.bf16.msra.mxu0 0
        %1702 = vmatprep.subr.bf16.mxu0 0
        %1703 = vmatpush1.bf16.msra.mxu0 0
        %1704 = vmatprep.subr.bf16.mxu0 0
        %1705 = vmatpush1.bf16.msra.mxu0 0
        %1706 = vmatprep.subr.bf16.mxu0 0
        %1707 = vmatpush1.bf16.msra.mxu0 0
        %1708 = vmatprep.subr.bf16.mxu0 0
        %1709 = vmatpush1.bf16.msra.mxu0 0
        %1710 = vmatprep.subr.bf16.mxu0 0
        %1711 = vmatpush1.bf16.msra.mxu0 0
        %1712 = vmatprep.subr.bf16.mxu0 0
        %1713 = vmatpush1.bf16.msra.mxu0 0
        %1714 = vmatprep.subr.bf16.mxu0 0
        %1715 = vmatpush1.bf16.msra.mxu0 0
        %1716 = vmatprep.subr.bf16.mxu0 0
        %1717 = vmatpush1.bf16.msra.mxu0 0
        %1718 = vmatprep.subr.bf16.mxu0 0
        %1719 = vmatpush1.bf16.msra.mxu0 0
        %1720 = vmatprep.subr.bf16.mxu0 0
        %1721 = vmatpush1.bf16.msra.mxu0 0
        %1722 = vmatprep.mubr.bf16.mxu0 0
        %1723 = vmatmul.mubr.bf16.gmra.mrb[0].mxu0 %v1685
        %v1724 = vpop.f32.mrb[0].mxu0
        %v1725 = vadd.f32 0.0, %v1724
        %v1726 = vpop.f32.mrb[0].mxu0
        %v1727 = vpop.f32.mrb[0].mxu0
        %v1728 = vpop.f32.mrb[0].mxu0
        %1729 = vdwg.mxu0
        %v1730 = vadd.f32 %v1680, %v1725
        %v1731 = vrcp.pop %v1679
        %v1732 = vmul.f32 %v1730, %v1731
        %1734 = vrot.lane.b32.xlu0 %v1732, 48
        %v1735 = vpop.permute.xlu0 %1734
        %vm1737 = vcmask 523648
        %1738 = vst.msk [vmem:[#allocation2] sm:$0xff] %vm1737, %v1735
        %v1739 = vld [vmem:[#allocation2] sm:$0xff]
        %v1740 = vpack.c.bf16 %v1739, %v1739
        %v1741 = vld [vmem:[#allocation14] sm:$0xf]
        %v1742 = vld [vmem:[#allocation14 + $0x4] sm:$0xf]
        %v1743 = vld [vmem:[#allocation14 + $0x8] sm:$0xf]
        %v1744 = vld [vmem:[#allocation14 + $0xc] sm:$0xf]
        %v1745 = vld [vmem:[#allocation14 + $0x10] sm:$0xf]
        %v1746 = vld [vmem:[#allocation14 + $0x14] sm:$0xf]
        %v1747 = vld [vmem:[#allocation14 + $0x18] sm:$0xf]
        %v1748 = vld [vmem:[#allocation14 + $0x1c] sm:$0xf]
        %v1749 = vld [vmem:[%s9] sm:$0x1]
        %v1751 = vlaneseq
        %v1752 = vshrl.u32 %v1751, 7
        %v1753 = vsub.s32 0, %v1752
        %v1754 = vrot.slane %v1749, %v1753
        %v1764 = vunpack.c.l.b16 %v1741
        %v1765 = vunpack.c.l.b16 %v1742
        %v1766 = vunpack.c.l.b16 %v1743
        %v1767 = vunpack.c.l.b16 %v1744
        %v1768 = vunpack.c.l.b16 %v1745
        %v1769 = vunpack.c.l.b16 %v1746
        %v1770 = vunpack.c.l.b16 %v1747
        %v1771 = vunpack.c.l.b16 %v1748
        %v1772 = vpack.c.b16 %v1765, %v1764
        %v1773 = vpack.c.b16 %v1767, %v1766
        %v1774 = vpack.c.b16 %v1769, %v1768
        %v1775 = vpack.c.b16 %v1771, %v1770
        %v1781 = vsel %vm597, %v1740, 0
        %1783 = vmatprep.subr.bf16.mxu0 0
        %1784 = vmatpush1.bf16.msra.mxu0 %v1772
        %1785 = vmatprep.subr.bf16.mxu0 0
        %1786 = vmatpush1.bf16.msra.mxu0 %v1773
        %1787 = vmatprep.subr.bf16.mxu0 0
        %1788 = vmatpush1.bf16.msra.mxu0 %v1774
        %1789 = vmatprep.subr.bf16.mxu0 0
        %1790 = vmatpush1.bf16.msra.mxu0 %v1775
        %1791 = vmatprep.subr.bf16.mxu0 0
        %1792 = vmatpush1.bf16.msra.mxu0 0
        %1793 = vmatprep.subr.bf16.mxu0 0
        %1794 = vmatpush1.bf16.msra.mxu0 0
        %1795 = vmatprep.subr.bf16.mxu0 0
        %1796 = vmatpush1.bf16.msra.mxu0 0
        %1797 = vmatprep.subr.bf16.mxu0 0
        %1798 = vmatpush1.bf16.msra.mxu0 0
        %1799 = vmatprep.subr.bf16.mxu0 0
        %1800 = vmatpush1.bf16.msra.mxu0 0
        %1801 = vmatprep.subr.bf16.mxu0 0
        %1802 = vmatpush1.bf16.msra.mxu0 0
        %1803 = vmatprep.subr.bf16.mxu0 0
        %1804 = vmatpush1.bf16.msra.mxu0 0
        %1805 = vmatprep.subr.bf16.mxu0 0
        %1806 = vmatpush1.bf16.msra.mxu0 0
        %1807 = vmatprep.subr.bf16.mxu0 0
        %1808 = vmatpush1.bf16.msra.mxu0 0
        %1809 = vmatprep.subr.bf16.mxu0 0
        %1810 = vmatpush1.bf16.msra.mxu0 0
        %1811 = vmatprep.subr.bf16.mxu0 0
        %1812 = vmatpush1.bf16.msra.mxu0 0
        %1813 = vmatprep.subr.bf16.mxu0 0
        %1814 = vmatpush1.bf16.msra.mxu0 0
        %1815 = vmatprep.mubr.bf16.mxu0 0
        %1816 = vmatmul.mubr.bf16.gmra.mrb[0].mxu0 %v1781
        %v1817 = vpop.f32.mrb[0].mxu0
        %v1818 = vadd.f32 %v1754, %v1817
        %v1819 = vpop.f32.mrb[0].mxu0
        %v1820 = vpop.f32.mrb[0].mxu0
        %v1821 = vpop.f32.mrb[0].mxu0
        %1822 = vdwg.mxu0
        %v1823 = vadd.f32 %v554, %v1818
        %v1824 = vld [vmem:[%s10] sm:$0x1]
        %v1825 = vld [vmem:[%s10 + $0x1] sm:$0x1]
        %v1826 = vsel %vm597, %v1823, 0.0
        %1827 = vadd.xlane.f32.xlu0 %v1826
        %v1828 = vpop.xlane.xlu0 %1827
        %v1829 = vrcp.pop 64.0
        %v1830 = vmul.f32 %v1828, %v1829
        %v1831 = vsub.f32 %v1823, %v1830
        %v1832 = vmul.f32 %v1831, %v1831
        %v1833 = vsel %vm597, %v1832, 0.0
        %1834 = vadd.xlane.f32.xlu0 %v1833
        %v1835 = vpop.xlane.xlu0 %1834
        %v1836 = vmul.f32 %v1835, %v1829
        %v1837 = vadd.f32 %v1836, 1e-05
        %v1838 = vrsqrt.pop %v1837
        %v1839 = vmul.f32 %v1831, %v1838
        %v1840 = vlaneseq
        %v1841 = vshrl.u32 %v1840, 7
        %v1842 = vsub.s32 0, %v1841
        %v1843 = vrot.slane %v1824, %v1842
        %v1844 = vmul.f32 %v1839, %v1843
        %v1845 = vlaneseq
        %v1846 = vshrl.u32 %v1845, 7
        %v1847 = vsub.s32 0, %v1846
        %v1848 = vrot.slane %v1825, %v1847
        %v1849 = vadd.f32 %v1844, %v1848
        %1850 = vst.msk [vmem:[%s552] sm:$0xff] %vm597, %v1849
        %s1851 = sand.u32 %s294, 1
        %s1852 = scalar_lea.sflag [#allocation5], %s1851
        %s1853 = sand.u32 %s294, 1
        %s1854 = smul.addr %s1853, 8
        %s1855 = scalar_lea.vmem [#allocation15], %s1854
        // Predicated region
        $region93: #{tpu_custom_call.1} parent=63 // pred_check
          %p1856 = pneg %p304
        $region94: #{tpu_custom_call.1} parent=63 // pred_check_branch
          %1858 = sbr.rel (%p1856) target = $region96
        $region95: #{tpu_custom_call.1} parent=63 // pred_region
          %s1860 = ssub.s32 128, 128
          %1861 = vsyncadd %s1852, %s1860
          %s1862 = smul.addr %s35, 128
          %s1863 = scalar_lea.hbm %s11, %s1862
          %s1865 = sshll.u32 %s1855, 4
          %s1866 = int_to_ptr.vmem [resolvable:$true] %s1865
          %1868 = dma.vmem_to_hbm [thread:$0]  %s1866, 128, %s1863, %s1852
        $region96: #{tpu_custom_call.1} parent=63 // pred_fallthru
          _
      $region64: #{tpu_custom_call.1} parent=5 // pred_fallthru
        _
      %p1869 = scmp.le.s32.totalorder 2, %s30
      // Predicated region
      $region97: #{tpu_custom_call.1} parent=5 // pred_check
        %p1870 = pneg %p1869
      $region98: #{tpu_custom_call.1} parent=5 // pred_check_branch
        %1872 = sbr.rel (%p1870) target = $region100
      $region99: #{tpu_custom_call.1} parent=5 // pred_region
        %s1873 = ssub.s32 %s30, 2
        // Predicated region
        $region101: #{tpu_custom_call.1} parent=99 // pred_check
          %p1874 = pneg %p310
        $region102: #{tpu_custom_call.1} parent=99 // pred_check_branch
          %1876 = sbr.rel (%p1874) target = $region104
        $region103: #{tpu_custom_call.1} parent=99 // pred_region
          %s1877 = sand.u32 %s295, 1
          %s1878 = scalar_lea.sflag [#allocation5], %s1877
          %s1879 = sand.u32 %s295, 1
          %s1880 = smul.addr %s1879, 8
          %s1881 = scalar_lea.vmem [#allocation15], %s1880
          %1882 = dma.done %s1878, 128
        $region104: #{tpu_custom_call.1} parent=99 // pred_fallthru
          _
      $region100: #{tpu_custom_call.1} parent=5 // pred_fallthru
        _
    $region6: #{tpu_custom_call.1} parent=1 // loop_footer
      %s34 = sadd.s32 1, %s30
    $region7: #{tpu_custom_call.1} parent=1 // loop_footer_branch
      %29 = sbr.rel target = $region3
    $region8: #{tpu_custom_call.1} parent=1 // loop_exit
      _
    %1883 = vsyncpa [#allocation4], 1
    %s1884 = scalar_lea.sflag [#allocation4], 1
    %1885 = vsyncpa %s1884, 1
    %1886 = vsyncpa [#allocation7], 1
    %s1887 = scalar_lea.sflag [#allocation7], 1
    %1888 = vsyncpa %s1887, 1
    %1889 = vsyncpa [#allocation10], 1
    %s1890 = scalar_lea.sflag [#allocation10], 1
    %1891 = vsyncpa %s1890, 1
    %1892 = vsyncpa [#allocation13], 1
    %1893 = vsyncpa [#allocation5], 1
    %s1894 = scalar_lea.sflag [#allocation5], 1
    %1895 = vsyncpa %s1894, 1

</llo_original>
